<compile_context>
chip_gen: v5e
topology: v5e:2x2
jax: 0.10.0
libtpu: 0.0.40
codegen_flags: <defaults>
</compile_context>

<pallas_src>
import functools

import jax
import jax.numpy as jnp
from jax.experimental import pallas as pl
from jax.experimental.pallas import tpu as pltpu


# ----------------------------- in-kernel helpers -----------------------------

def _mm(a, b):        # a @ b
    return jax.lax.dot_general(a, b, (((1,), (0,)), ((), ())),
                               preferred_element_type=jnp.float32)


def _mtm(a, b):       # a.T @ b
    return jax.lax.dot_general(a, b, (((0,), (0,)), ((), ())),
                               preferred_element_type=jnp.float32)


def _mmt(a, b):       # a @ b.T
    return jax.lax.dot_general(a, b, (((1,), (1,)), ((), ())),
                               preferred_element_type=jnp.float32)


def _softmax(h):
    m = jnp.max(h, axis=-1, keepdims=True)
    e = jnp.exp(h - m)
    return e / jnp.sum(e, axis=-1, keepdims=True)


def _sum_all_2d(x):   # full reduction of a 2-D tile, kept 2-D -> shape (1, 1)
    return jnp.sum(jnp.sum(x, axis=1, keepdims=True), axis=0, keepdims=True)


# --------------------------------- kernels -----------------------------------

def _stage1_kernel(adj_ref, x_ref, emb_wr_ref, emb_ws_ref, pool_wr_ref,
                   pool_ws_ref, x1_ref, a1_ref, lpl_ref, ent_ref, *, num_rel):
    # adj_ref: (1, R, N, N)   x_ref: (1, N, D)
    # emb_wr_ref: (R, D, H)   emb_ws_ref: (D, H)
    # pool_wr_ref: (R, D, C1) pool_ws_ref: (D, C1)
    a = adj_ref[0]                        # (R, N, N)
    x = x_ref[0]                          # (N, D)

    # Compute A[r] @ X once per relation; reuse for BOTH heads.  Also collapse
    # the relation axis of the adjacency here (no separate XLA reduce).
    a_col = a[0]
    ax = [_mm(a[0], x)]
    for r in range(1, num_rel):
        ar = a[r]
        a_col = a_col + ar
        ax.append(_mm(ar, x))

    # RGCN heads, reassociated as (A[r] @ X) @ W_r  (D < H -> fewer FLOPs).
    h_emb = _mm(x, emb_ws_ref[...])
    h_pool = _mm(x, pool_ws_ref[...])
    for r in range(num_rel):
        h_emb = h_emb + _mm(ax[r], emb_wr_ref[r])
        h_pool = h_pool + _mm(ax[r], pool_wr_ref[r])

    z = jnp.maximum(h_emb, 0.0)           # (N, H)   embed
    s = _softmax(h_pool)                  # (N, C1)  soft cluster assignments

    # DiffPool pooling.
    x1_ref[0] = _mtm(s, z).astype(x1_ref.dtype)                 # S^T Z
    a1_ref[0] = _mtm(s, _mm(a_col, s)).astype(a1_ref.dtype)     # S^T A S

    # DiffPool losses, reduced to per-graph scalars in-kernel (S S^T never
    # leaves VMEM).
    diff = a_col - _mmt(s, s)
    lpl_ref[0] = jnp.sqrt(_sum_all_2d(diff * diff) + 1e-12)
    ent_ref[0] = -_sum_all_2d(s * jnp.log(s + 1e-12))


def _stage2_kernel(a1_ref, x1_ref, gemb_w_ref, gpool_w_ref, ff_w_ref, ff_b_ref,
                   cls_w_ref, cls_b_ref, val_w_ref, val_b_ref,
                   val_ref, dscr_ref, lpl_ref, ent_ref, *, num_clusters):
    # a1_ref: (1, C1, C1)  x1_ref: (1, C1, H)
    # gemb_w_ref: (H, Hg)  gpool_w_ref: (H, C2)  ff_w_ref: (C2, Hg, F)
    a1 = a1_ref[0]                        # (C1, C1)
    x1 = x1_ref[0]                        # (C1, H)

    # GCN heads sharing A1 @ X1.
    axx = _mm(a1, x1)                                  # (C1, H)
    z1 = jnp.maximum(_mm(axx, gemb_w_ref[...]), 0.0)   # (C1, Hg)
    s1 = _softmax(_mm(axx, gpool_w_ref[...]))          # (C1, C2)

    # DiffPool pooling + losses.
    x2 = _mtm(s1, z1)                                  # (C2, Hg)
    diff = a1 - _mmt(s1, s1)
    lpl_ref[0] = jnp.sqrt(_sum_all_2d(diff * diff) + 1e-12)
    ent_ref[0] = -_sum_all_2d(s1 * jnp.log(s1 + 1e-12))

    # Feed-forward heads, fused.  flatten(x2) @ W_ff == sum_c x2[c] @ W_ff[c].
    h = ff_b_ref[...]                                  # (1, F)
    for c in range(num_clusters):
        h = h + _mm(x2[c:c + 1, :], ff_w_ref[c])
    h = jnp.maximum(h, 0.0)
    dscr_ref[0] = (_mm(h, cls_w_ref[...]) + cls_b_ref[...]).astype(dscr_ref.dtype)
    val_ref[0] = (_mm(h, val_w_ref[...]) + val_b_ref[...]).astype(val_ref.dtype)


# -------------------------------- wrappers ------------------------------------

_PARALLEL = pltpu.CompilerParams(dimension_semantics=("parallel",))


def stage1(adj, x, emb_wr, emb_ws, pool_wr, pool_ws):
    B, R, N, _ = adj.shape
    D = x.shape[-1]
    H = emb_ws.shape[-1]
    C1 = pool_ws.shape[-1]
    return pl.pallas_call(
        functools.partial(_stage1_kernel, num_rel=R),
        out_shape=(
            jax.ShapeDtypeStruct((B, C1, H), jnp.float32),   # x1 = S^T Z
            jax.ShapeDtypeStruct((B, C1, C1), jnp.float32),  # a1 = S^T A S
            jax.ShapeDtypeStruct((B, 1, 1), jnp.float32),    # link-pred loss / graph
            jax.ShapeDtypeStruct((B, 1, 1), jnp.float32),    # entropy sum / graph
        ),
        grid=(B,),
        in_specs=[
            pl.BlockSpec((1, R, N, N), lambda b: (b, 0, 0, 0)),
            pl.BlockSpec((1, N, D), lambda b: (b, 0, 0)),
            pl.BlockSpec((R, D, H), lambda b: (0, 0, 0)),
            pl.BlockSpec((D, H), lambda b: (0, 0)),
            pl.BlockSpec((R, D, C1), lambda b: (0, 0, 0)),
            pl.BlockSpec((D, C1), lambda b: (0, 0)),
        ],
        out_specs=(
            pl.BlockSpec((1, C1, H), lambda b: (b, 0, 0)),
            pl.BlockSpec((1, C1, C1), lambda b: (b, 0, 0)),
            pl.BlockSpec((1, 1, 1), lambda b: (b, 0, 0)),
            pl.BlockSpec((1, 1, 1), lambda b: (b, 0, 0)),
        ),
        compiler_params=_PARALLEL,
    )(adj, x, emb_wr, emb_ws, pool_wr, pool_ws)


def stage2(a1, x1, gemb_w, gpool_w, ff_w3, ff_b, cls_w, cls_b, val_w, val_b):
    B, C1, _ = a1.shape
    H = x1.shape[-1]
    Hg = gemb_w.shape[-1]
    C2 = gpool_w.shape[-1]
    F = ff_w3.shape[-1]
    NC = cls_w.shape[-1]
    return pl.pallas_call(
        functools.partial(_stage2_kernel, num_clusters=C2),
        out_shape=(
            jax.ShapeDtypeStruct((B, 1, 1), jnp.float32),    # value logit
            jax.ShapeDtypeStruct((B, 1, NC), jnp.float32),   # class logits
            jax.ShapeDtypeStruct((B, 1, 1), jnp.float32),    # link-pred loss / graph
            jax.ShapeDtypeStruct((B, 1, 1), jnp.float32),    # entropy sum / graph
        ),
        grid=(B,),
        in_specs=[
            pl.BlockSpec((1, C1, C1), lambda b: (b, 0, 0)),
            pl.BlockSpec((1, C1, H), lambda b: (b, 0, 0)),
            pl.BlockSpec((H, Hg), lambda b: (0, 0)),
            pl.BlockSpec((H, C2), lambda b: (0, 0)),
            pl.BlockSpec((C2, Hg, F), lambda b: (0, 0, 0)),
            pl.BlockSpec((1, F), lambda b: (0, 0)),
            pl.BlockSpec((F, NC), lambda b: (0, 0)),
            pl.BlockSpec((1, NC), lambda b: (0, 0)),
            pl.BlockSpec((F, 1), lambda b: (0, 0)),
            pl.BlockSpec((1, 1), lambda b: (0, 0)),
        ],
        out_specs=(
            pl.BlockSpec((1, 1, 1), lambda b: (b, 0, 0)),
            pl.BlockSpec((1, 1, NC), lambda b: (b, 0, 0)),
            pl.BlockSpec((1, 1, 1), lambda b: (b, 0, 0)),
            pl.BlockSpec((1, 1, 1), lambda b: (b, 0, 0)),
        ),
        compiler_params=_PARALLEL,
    )(a1, x1, gemb_w, gpool_w, ff_w3, ff_b, cls_w, cls_b, val_w, val_b)


# ----------------------------- model definition -------------------------------

def init_params(key, d_dim, r_dim, n_dim, num_classes, cfg):
    h_emb = cfg["embed_rgcn_layer_params"][0]   # RGCN embed hidden
    c1 = cfg["pool_rgcn_layer_params"][0]       # clusters after stage 1
    h_gcn = cfg["embed_gcn_layer_params"][0]    # GCN embed hidden
    c2 = cfg["pool_gcn_layer_params"][0]        # clusters after stage 2
    h_ff = cfg["ff_layer_params"][0]            # FF hidden

    def glorot(k, shape):
        fan_in, fan_out = shape[-2], shape[-1]
        scale = jnp.sqrt(2.0 / (fan_in + fan_out))
        return scale * jax.random.normal(k, shape, dtype=jnp.float32)

    ks = jax.random.split(key, 12)
    p = {
        "emb_wr":  glorot(ks[0], (r_dim, d_dim, h_emb)),
        "emb_ws":  glorot(ks[1], (d_dim, h_emb)),
        "pool_wr": glorot(ks[2], (r_dim, d_dim, c1)),
        "pool_ws": glorot(ks[3], (d_dim, c1)),
        "gemb_w":  glorot(ks[4], (h_emb, h_gcn)),
        "gpool_w": glorot(ks[5], (h_emb, c2)),
        "ff_w":    glorot(ks[6], (c2 * h_gcn, h_ff)),
        "ff_b":    jnp.zeros((1, h_ff), jnp.float32),
        "cls_w":   glorot(ks[7], (h_ff, num_classes)),
        "cls_b":   jnp.zeros((1, num_classes), jnp.float32),
        "val_w":   glorot(ks[8], (h_ff, 1)),
        "val_b":   jnp.zeros((1, 1), jnp.float32),
    }
    return p


@jax.jit
def dipol_dscr_forward(params, adj, x):
    """adj: [B, R, N, N] float32, x: [B, N, D] float32."""
    B, _, N, _ = adj.shape

    # ---- stage 1: fused relational embed/pool + DiffPool + losses ----
    x1, a1, lpl0_b, ent0_b = stage1(
        adj, x, params["emb_wr"], params["emb_ws"],
        params["pool_wr"], params["pool_ws"])
    C1 = a1.shape[-1]

    # ---- stage 2: fused GCN embed/pool + DiffPool + losses + FF heads ----
    Hg = params["gemb_w"].shape[-1]
    C2 = params["gpool_w"].shape[-1]
    ff_w3 = params["ff_w"].reshape(C2, Hg, -1)   # row-major flatten matches torch
    val_b3, dscr_b3, lpl1_b, ent1_b = stage2(
        a1, x1, params["gemb_w"], params["gpool_w"], ff_w3,
        params["ff_b"], params["cls_w"], params["cls_b"],
        params["val_w"], params["val_b"])

    value_logits = val_b3.reshape(B, 1)
    dscr_logits = dscr_b3.reshape(B, -1)

    # scalar glue: mean per-graph losses over the batch (trivial XLA reduces)
    lpl0 = jnp.mean(lpl0_b)
    lpl1 = jnp.mean(lpl1_b)
    le0 = jnp.sum(ent0_b) / (B * N)    # mean row-entropy of S0 (N rows / graph)
    le1 = jnp.sum(ent1_b) / (B * C1)   # mean row-entropy of S1 (C1 rows / graph)

    # matches: (value_logits, dscr_logits, [sum(stack(lpls)), sum(stack(les))])
    return value_logits, dscr_logits, [lpl0 + lpl1, le0 + le1]


# ----------------------------------- main --------------------------------------

if __name__ == "__main__":
    # small shapes consistent with the module: molecular-graph style inputs
    B, R, N, D = 2, 3, 8, 4          # batch, bond types (r_dim), nodes (n_dim), atom feats (d_dim)
    Z_DIM = 32                        # (generator latent size; unused by the discriminator path)
    NUM_CLASSES = 2
    model_config = {"dscr": {
        "embed_rgcn_layer_params": [32],
        "pool_rgcn_layer_params": [4],
        "embed_gcn_layer_params": [32],
        "pool_gcn_layer_params": [2],
        "ff_layer_params": [64],
    }}

    key = jax.random.PRNGKey(0)
    k_adj, k_x, k_p = jax.random.split(key, 3)

    adj_raw = jax.random.uniform(k_adj, (B, R, N, N), dtype=jnp.float32)
    adj = 0.5 * (adj_raw + jnp.swapaxes(adj_raw, -1, -2))   # symmetric non-negative adjacency
    x = jax.random.normal(k_x, (B, N, D), dtype=jnp.float32)

    params = init_params(k_p, D, R, N, NUM_CLASSES, model_config["dscr"])

    value_logits, dscr_logits, (lpl_sum, le_sum) = dipol_dscr_forward(params, adj, x)
    jax.block_until_ready((value_logits, dscr_logits, lpl_sum, le_sum))

    assert value_logits.shape == (B, 1)
    assert dscr_logits.shape == (B, NUM_CLASSES)
    assert lpl_sum.shape == () and le_sum.shape == ()
    assert bool(jnp.all(jnp.isfinite(value_logits)))
    assert bool(jnp.all(jnp.isfinite(dscr_logits)))
    assert bool(jnp.isfinite(lpl_sum)) and bool(jnp.isfinite(le_sum))
    print("KERNEL_OK")
</pallas_src>

<mosaic_0001>
module attributes {stable_mosaic.version = 11 : i64} {
  func.func @_stage1_kernel(%arg0: i32, %arg1: memref<1x3x8x8xf32, #tpu.memory_space<vmem>>, %arg2: memref<1x8x4xf32, #tpu.memory_space<vmem>>, %arg3: memref<3x4x32xf32, #tpu.memory_space<vmem>>, %arg4: memref<4x32xf32, #tpu.memory_space<vmem>>, %arg5: memref<3x4x4xf32, #tpu.memory_space<vmem>>, %arg6: memref<4x4xf32, #tpu.memory_space<vmem>>, %arg7: memref<1x4x32xf32, #tpu.memory_space<vmem>>, %arg8: memref<1x4x4xf32, #tpu.memory_space<vmem>>, %arg9: memref<1x1x1xf32, #tpu.memory_space<vmem>>, %arg10: memref<1x1x1xf32, #tpu.memory_space<vmem>>) attributes {dimension_semantics = [#tpu.dimension_semantics<parallel>], iteration_bounds = array<i64: 2>, scalar_prefetch = 0 : i64, scratch_operands = 0 : i64, tpu.core_type = #tpu.core_type<tc>, window_params = [{transform_indices = @transform_0, window_bounds = array<i64: 1, 3, 8, 8>}, {transform_indices = @transform_1, window_bounds = array<i64: 1, 8, 4>}, {pipeline_mode = #tpu.pipeline_mode<synchronous>, transform_indices = @transform_2, window_bounds = array<i64: 3, 4, 32>}, {pipeline_mode = #tpu.pipeline_mode<synchronous>, transform_indices = @transform_3, window_bounds = array<i64: 4, 32>}, {pipeline_mode = #tpu.pipeline_mode<synchronous>, transform_indices = @transform_4, window_bounds = array<i64: 3, 4, 4>}, {pipeline_mode = #tpu.pipeline_mode<synchronous>, transform_indices = @transform_5, window_bounds = array<i64: 4, 4>}, {transform_indices = @transform_6, window_bounds = array<i64: 1, 4, 32>}, {transform_indices = @transform_7, window_bounds = array<i64: 1, 4, 4>}, {transform_indices = @transform_8, window_bounds = array<i64: 1, 1, 1>}, {transform_indices = @transform_9, window_bounds = array<i64: 1, 1, 1>}]} {
    %c0 = arith.constant 0 : index
    %c0_0 = arith.constant 0 : index
    %c0_1 = arith.constant 0 : index
    %c0_2 = arith.constant 0 : index
    %0 = vector.load %arg1[%c0, %c0_0, %c0_1, %c0_2] : memref<1x3x8x8xf32, #tpu.memory_space<vmem>>, vector<1x3x8x8xf32>
    %1 = vector.shape_cast %0 : vector<1x3x8x8xf32> to vector<3x8x8xf32>
    %c0_3 = arith.constant 0 : index
    %c0_4 = arith.constant 0 : index
    %c0_5 = arith.constant 0 : index
    %2 = vector.load %arg2[%c0_3, %c0_4, %c0_5] : memref<1x8x4xf32, #tpu.memory_space<vmem>>, vector<1x8x4xf32>
    %3 = vector.shape_cast %2 : vector<1x8x4xf32> to vector<8x4xf32>
    %4 = vector.extract_strided_slice %1 {offsets = [0, 0, 0], sizes = [1, 8, 8], strides = [1, 1, 1]} : vector<3x8x8xf32> to vector<1x8x8xf32>
    %5 = vector.shape_cast %4 : vector<1x8x8xf32> to vector<8x8xf32>
    %6 = vector.extract_strided_slice %1 {offsets = [0, 0, 0], sizes = [1, 8, 8], strides = [1, 1, 1]} : vector<3x8x8xf32> to vector<1x8x8xf32>
    %7 = vector.shape_cast %6 : vector<1x8x8xf32> to vector<8x8xf32>
    %cst = arith.constant dense<0.000000e+00> : vector<8x4xf32>
    %8 = tpu.matmul %7, %3, %cst {dimension_numbers = #tpu.dot_dimension_numbers<[1], [0], [0], [1], [0, 0, 1, 1], [], []>} : vector<8x8xf32>, vector<8x4xf32>, vector<8x4xf32> -> vector<8x4xf32>
    %9 = vector.extract_strided_slice %1 {offsets = [1, 0, 0], sizes = [1, 8, 8], strides = [1, 1, 1]} : vector<3x8x8xf32> to vector<1x8x8xf32>
    %10 = vector.shape_cast %9 : vector<1x8x8xf32> to vector<8x8xf32>
    %11 = arith.addf %5, %10 : vector<8x8xf32>
    %cst_6 = arith.constant dense<0.000000e+00> : vector<8x4xf32>
    %12 = tpu.matmul %10, %3, %cst_6 {dimension_numbers = #tpu.dot_dimension_numbers<[1], [0], [0], [1], [0, 0, 1, 1], [], []>} : vector<8x8xf32>, vector<8x4xf32>, vector<8x4xf32> -> vector<8x4xf32>
    %13 = vector.extract_strided_slice %1 {offsets = [2, 0, 0], sizes = [1, 8, 8], strides = [1, 1, 1]} : vector<3x8x8xf32> to vector<1x8x8xf32>
    %14 = vector.shape_cast %13 : vector<1x8x8xf32> to vector<8x8xf32>
    %15 = arith.addf %11, %14 : vector<8x8xf32>
    %cst_7 = arith.constant dense<0.000000e+00> : vector<8x4xf32>
    %16 = tpu.matmul %14, %3, %cst_7 {dimension_numbers = #tpu.dot_dimension_numbers<[1], [0], [0], [1], [0, 0, 1, 1], [], []>} : vector<8x8xf32>, vector<8x4xf32>, vector<8x4xf32> -> vector<8x4xf32>
    %c0_8 = arith.constant 0 : index
    %c0_9 = arith.constant 0 : index
    %17 = vector.load %arg4[%c0_8, %c0_9] : memref<4x32xf32, #tpu.memory_space<vmem>>, vector<4x32xf32>
    %cst_10 = arith.constant dense<0.000000e+00> : vector<8x32xf32>
    %18 = tpu.matmul %3, %17, %cst_10 {dimension_numbers = #tpu.dot_dimension_numbers<[1], [0], [0], [1], [0, 0, 1, 1], [], []>} : vector<8x4xf32>, vector<4x32xf32>, vector<8x32xf32> -> vector<8x32xf32>
    %c0_11 = arith.constant 0 : index
    %c0_12 = arith.constant 0 : index
    %19 = vector.load %arg6[%c0_11, %c0_12] : memref<4x4xf32, #tpu.memory_space<vmem>>, vector<4x4xf32>
    %cst_13 = arith.constant dense<0.000000e+00> : vector<8x4xf32>
    %20 = tpu.matmul %3, %19, %cst_13 {dimension_numbers = #tpu.dot_dimension_numbers<[1], [0], [0], [1], [0, 0, 1, 1], [], []>} : vector<8x4xf32>, vector<4x4xf32>, vector<8x4xf32> -> vector<8x4xf32>
    %c0_14 = arith.constant 0 : index
    %c0_15 = arith.constant 0 : index
    %c0_16 = arith.constant 0 : index
    %21 = vector.load %arg3[%c0_14, %c0_15, %c0_16] : memref<3x4x32xf32, #tpu.memory_space<vmem>>, vector<1x4x32xf32>
    %22 = vector.shape_cast %21 : vector<1x4x32xf32> to vector<4x32xf32>
    %cst_17 = arith.constant dense<0.000000e+00> : vector<8x32xf32>
    %23 = tpu.matmul %8, %22, %cst_17 {dimension_numbers = #tpu.dot_dimension_numbers<[1], [0], [0], [1], [0, 0, 1, 1], [], []>} : vector<8x4xf32>, vector<4x32xf32>, vector<8x32xf32> -> vector<8x32xf32>
    %24 = arith.addf %18, %23 : vector<8x32xf32>
    %c0_18 = arith.constant 0 : index
    %c0_19 = arith.constant 0 : index
    %c0_20 = arith.constant 0 : index
    %25 = vector.load %arg5[%c0_18, %c0_19, %c0_20] : memref<3x4x4xf32, #tpu.memory_space<vmem>>, vector<1x4x4xf32>
    %26 = vector.shape_cast %25 : vector<1x4x4xf32> to vector<4x4xf32>
    %cst_21 = arith.constant dense<0.000000e+00> : vector<8x4xf32>
    %27 = tpu.matmul %8, %26, %cst_21 {dimension_numbers = #tpu.dot_dimension_numbers<[1], [0], [0], [1], [0, 0, 1, 1], [], []>} : vector<8x4xf32>, vector<4x4xf32>, vector<8x4xf32> -> vector<8x4xf32>
    %28 = arith.addf %20, %27 : vector<8x4xf32>
    %c1 = arith.constant 1 : index
    %c0_22 = arith.constant 0 : index
    %c0_23 = arith.constant 0 : index
    %29 = vector.load %arg3[%c1, %c0_22, %c0_23] : memref<3x4x32xf32, #tpu.memory_space<vmem>>, vector<1x4x32xf32>
    %30 = vector.shape_cast %29 : vector<1x4x32xf32> to vector<4x32xf32>
    %cst_24 = arith.constant dense<0.000000e+00> : vector<8x32xf32>
    %31 = tpu.matmul %12, %30, %cst_24 {dimension_numbers = #tpu.dot_dimension_numbers<[1], [0], [0], [1], [0, 0, 1, 1], [], []>} : vector<8x4xf32>, vector<4x32xf32>, vector<8x32xf32> -> vector<8x32xf32>
    %32 = arith.addf %24, %31 : vector<8x32xf32>
    %c1_25 = arith.constant 1 : index
    %c0_26 = arith.constant 0 : index
    %c0_27 = arith.constant 0 : index
    %33 = vector.load %arg5[%c1_25, %c0_26, %c0_27] : memref<3x4x4xf32, #tpu.memory_space<vmem>>, vector<1x4x4xf32>
    %34 = vector.shape_cast %33 : vector<1x4x4xf32> to vector<4x4xf32>
    %cst_28 = arith.constant dense<0.000000e+00> : vector<8x4xf32>
    %35 = tpu.matmul %12, %34, %cst_28 {dimension_numbers = #tpu.dot_dimension_numbers<[1], [0], [0], [1], [0, 0, 1, 1], [], []>} : vector<8x4xf32>, vector<4x4xf32>, vector<8x4xf32> -> vector<8x4xf32>
    %36 = arith.addf %28, %35 : vector<8x4xf32>
    %c2 = arith.constant 2 : index
    %c0_29 = arith.constant 0 : index
    %c0_30 = arith.constant 0 : index
    %37 = vector.load %arg3[%c2, %c0_29, %c0_30] : memref<3x4x32xf32, #tpu.memory_space<vmem>>, vector<1x4x32xf32>
    %38 = vector.shape_cast %37 : vector<1x4x32xf32> to vector<4x32xf32>
    %cst_31 = arith.constant dense<0.000000e+00> : vector<8x32xf32>
    %39 = tpu.matmul %16, %38, %cst_31 {dimension_numbers = #tpu.dot_dimension_numbers<[1], [0], [0], [1], [0, 0, 1, 1], [], []>} : vector<8x4xf32>, vector<4x32xf32>, vector<8x32xf32> -> vector<8x32xf32>
    %40 = arith.addf %32, %39 : vector<8x32xf32>
    %c2_32 = arith.constant 2 : index
    %c0_33 = arith.constant 0 : index
    %c0_34 = arith.constant 0 : index
    %41 = vector.load %arg5[%c2_32, %c0_33, %c0_34] : memref<3x4x4xf32, #tpu.memory_space<vmem>>, vector<1x4x4xf32>
    %42 = vector.shape_cast %41 : vector<1x4x4xf32> to vector<4x4xf32>
    %cst_35 = arith.constant dense<0.000000e+00> : vector<8x4xf32>
    %43 = tpu.matmul %16, %42, %cst_35 {dimension_numbers = #tpu.dot_dimension_numbers<[1], [0], [0], [1], [0, 0, 1, 1], [], []>} : vector<8x4xf32>, vector<4x4xf32>, vector<8x4xf32> -> vector<8x4xf32>
    %44 = arith.addf %36, %43 : vector<8x4xf32>
    %cst_36 = arith.constant 0.000000e+00 : f32
    %45 = vector.broadcast %cst_36 : f32 to vector<8x32xf32>
    %46 = arith.maximumf %40, %45 : vector<8x32xf32>
    %cst_37 = arith.constant dense<0xFF800000> : vector<8xf32>
    %47 = vector.multi_reduction <maximumf>, %44, %cst_37 [1] : vector<8x4xf32> to vector<8xf32>
    %48 = vector.shape_cast %47 : vector<8xf32> to vector<8x1xf32>
    %49 = vector.broadcast %48 : vector<8x1xf32> to vector<8x4xf32>
    %50 = arith.subf %44, %49 : vector<8x4xf32>
    %51 = math.exp %50 : vector<8x4xf32>
    %cst_38 = arith.constant dense<0.000000e+00> : vector<8xf32>
    %52 = vector.multi_reduction <add>, %51, %cst_38 [1] : vector<8x4xf32> to vector<8xf32>
    %53 = vector.shape_cast %52 : vector<8xf32> to vector<8x1xf32>
    %54 = vector.broadcast %53 : vector<8x1xf32> to vector<8x4xf32>
    %55 = arith.divf %51, %54 : vector<8x4xf32>
    %cst_39 = arith.constant dense<0.000000e+00> : vector<4x32xf32>
    %56 = tpu.matmul %55, %46, %cst_39 {dimension_numbers = #tpu.dot_dimension_numbers<[0], [0], [1], [1], [0, 1, 1, 1], [], []>} : vector<8x4xf32>, vector<8x32xf32>, vector<4x32xf32> -> vector<4x32xf32>
    %c0_40 = arith.constant 0 : index
    %c0_41 = arith.constant 0 : index
    %c0_42 = arith.constant 0 : index
    %57 = vector.load %arg7[%c0_40, %c0_41, %c0_42] : memref<1x4x32xf32, #tpu.memory_space<vmem>>, vector<1x4x32xf32>
    %58 = vector.shape_cast %57 : vector<1x4x32xf32> to vector<4x32xf32>
    %59 = vector.shape_cast %56 : vector<4x32xf32> to vector<1x4x32xf32>
    tpu.vector_store %arg7[%c0_40, %c0_41, %c0_42], %59 {strides = array<i32>} : memref<1x4x32xf32, #tpu.memory_space<vmem>>, vector<1x4x32xf32>,
    %cst_43 = arith.constant dense<0.000000e+00> : vector<8x4xf32>
    %60 = tpu.matmul %15, %55, %cst_43 {dimension_numbers = #tpu.dot_dimension_numbers<[1], [0], [0], [1], [0, 0, 1, 1], [], []>} : vector<8x8xf32>, vector<8x4xf32>, vector<8x4xf32> -> vector<8x4xf32>
    %cst_44 = arith.constant dense<0.000000e+00> : vector<4x4xf32>
    %61 = tpu.matmul %55, %60, %cst_44 {dimension_numbers = #tpu.dot_dimension_numbers<[0], [0], [1], [1], [0, 1, 1, 1], [], []>} : vector<8x4xf32>, vector<8x4xf32>, vector<4x4xf32> -> vector<4x4xf32>
    %c0_45 = arith.constant 0 : index
    %c0_46 = arith.constant 0 : index
    %c0_47 = arith.constant 0 : index
    %62 = vector.load %arg8[%c0_45, %c0_46, %c0_47] : memref<1x4x4xf32, #tpu.memory_space<vmem>>, vector<1x4x4xf32>
    %63 = vector.shape_cast %62 : vector<1x4x4xf32> to vector<4x4xf32>
    %64 = vector.shape_cast %61 : vector<4x4xf32> to vector<1x4x4xf32>
    tpu.vector_store %arg8[%c0_45, %c0_46, %c0_47], %64 {strides = array<i32>} : memref<1x4x4xf32, #tpu.memory_space<vmem>>, vector<1x4x4xf32>,
    %cst_48 = arith.constant dense<0.000000e+00> : vector<8x8xf32>
    %65 = tpu.matmul %55, %55, %cst_48 {dimension_numbers = #tpu.dot_dimension_numbers<[1], [1], [0], [0], [0, 0, 1, 0], [], []>} : vector<8x4xf32>, vector<8x4xf32>, vector<8x8xf32> -> vector<8x8xf32>
    %66 = arith.subf %15, %65 : vector<8x8xf32>
    %67 = arith.mulf %66, %66 : vector<8x8xf32>
    %cst_49 = arith.constant dense<0.000000e+00> : vector<8xf32>
    %68 = vector.multi_reduction <add>, %67, %cst_49 [1] : vector<8x8xf32> to vector<8xf32>
    %69 = vector.shape_cast %68 : vector<8xf32> to vector<8x1xf32>
    %cst_50 = arith.constant dense<0.000000e+00> : vector<1xf32>
    %70 = vector.multi_reduction <add>, %69, %cst_50 [0] : vector<8x1xf32> to vector<1xf32>
    %71 = vector.shape_cast %70 : vector<1xf32> to vector<1x1xf32>
    %cst_51 = arith.constant 9.99999996E-13 : f32
    %72 = vector.broadcast %cst_51 : f32 to vector<1x1xf32>
    %73 = arith.addf %71, %72 : vector<1x1xf32>
    %74 = math.sqrt %73 : vector<1x1xf32>
    %c0_52 = arith.constant 0 : index
    %c0_53 = arith.constant 0 : index
    %c0_54 = arith.constant 0 : index
    %75 = vector.load %arg9[%c0_52, %c0_53, %c0_54] : memref<1x1x1xf32, #tpu.memory_space<vmem>>, vector<1x1x1xf32>
    %76 = vector.shape_cast %75 : vector<1x1x1xf32> to vector<1x1xf32>
    %77 = vector.shape_cast %74 : vector<1x1xf32> to vector<1x1x1xf32>
    tpu.vector_store %arg9[%c0_52, %c0_53, %c0_54], %77 {strides = array<i32>} : memref<1x1x1xf32, #tpu.memory_space<vmem>>, vector<1x1x1xf32>,
    %cst_55 = arith.constant 9.99999996E-13 : f32
    %78 = vector.broadcast %cst_55 : f32 to vector<8x4xf32>
    %79 = arith.addf %55, %78 : vector<8x4xf32>
    %80 = math.log %79 : vector<8x4xf32>
    %81 = arith.mulf %55, %80 : vector<8x4xf32>
    %cst_56 = arith.constant dense<0.000000e+00> : vector<8xf32>
    %82 = vector.multi_reduction <add>, %81, %cst_56 [1] : vector<8x4xf32> to vector<8xf32>
    %83 = vector.shape_cast %82 : vector<8xf32> to vector<8x1xf32>
    %cst_57 = arith.constant dense<0.000000e+00> : vector<1xf32>
    %84 = vector.multi_reduction <add>, %83, %cst_57 [0] : vector<8x1xf32> to vector<1xf32>
    %85 = vector.shape_cast %84 : vector<1xf32> to vector<1x1xf32>
    %cst_58 = arith.constant 0.000000e+00 : f32
    %86 = vector.broadcast %cst_58 : f32 to vector<1x1xf32>
    %87 = arith.subf %86, %85 : vector<1x1xf32>
    %c0_59 = arith.constant 0 : index
    %c0_60 = arith.constant 0 : index
    %c0_61 = arith.constant 0 : index
    %88 = vector.load %arg10[%c0_59, %c0_60, %c0_61] : memref<1x1x1xf32, #tpu.memory_space<vmem>>, vector<1x1x1xf32>
    %89 = vector.shape_cast %88 : vector<1x1x1xf32> to vector<1x1xf32>
    %90 = vector.shape_cast %87 : vector<1x1xf32> to vector<1x1x1xf32>
    tpu.vector_store %arg10[%c0_59, %c0_60, %c0_61], %90 {strides = array<i32>} : memref<1x1x1xf32, #tpu.memory_space<vmem>>, vector<1x1x1xf32>,
    return
  }
  func.func @transform_0(%arg0: i32) -> (i32, i32, i32, i32) {
    %c0_i32 = arith.constant 0 : i32
    %c0_i32_0 = arith.constant 0 : i32
    %c0_i32_1 = arith.constant 0 : i32
    %c0_i32_2 = arith.constant 0 : i32
    return %arg0, %c0_i32, %c0_i32_0, %c0_i32_1 : i32, i32, i32, i32
  }
  func.func @transform_1(%arg0: i32) -> (i32, i32, i32) {
    %c0_i32 = arith.constant 0 : i32
    %c0_i32_0 = arith.constant 0 : i32
    %c0_i32_1 = arith.constant 0 : i32
    return %arg0, %c0_i32, %c0_i32_0 : i32, i32, i32
  }
  func.func @transform_2(%arg0: i32) -> (i32, i32, i32) {
    %c0_i32 = arith.constant 0 : i32
    %c0_i32_0 = arith.constant 0 : i32
    %c0_i32_1 = arith.constant 0 : i32
    %c0_i32_2 = arith.constant 0 : i32
    return %c0_i32, %c0_i32_0, %c0_i32_1 : i32, i32, i32
  }
  func.func @transform_3(%arg0: i32) -> (i32, i32) {
    %c0_i32 = arith.constant 0 : i32
    %c0_i32_0 = arith.constant 0 : i32
    %c0_i32_1 = arith.constant 0 : i32
    return %c0_i32, %c0_i32_0 : i32, i32
  }
  func.func @transform_4(%arg0: i32) -> (i32, i32, i32) {
    %c0_i32 = arith.constant 0 : i32
    %c0_i32_0 = arith.constant 0 : i32
    %c0_i32_1 = arith.constant 0 : i32
    %c0_i32_2 = arith.constant 0 : i32
    return %c0_i32, %c0_i32_0, %c0_i32_1 : i32, i32, i32
  }
  func.func @transform_5(%arg0: i32) -> (i32, i32) {
    %c0_i32 = arith.constant 0 : i32
    %c0_i32_0 = arith.constant 0 : i32
    %c0_i32_1 = arith.constant 0 : i32
    return %c0_i32, %c0_i32_0 : i32, i32
  }
  func.func @transform_6(%arg0: i32) -> (i32, i32, i32) {
    %c0_i32 = arith.constant 0 : i32
    %c0_i32_0 = arith.constant 0 : i32
    %c0_i32_1 = arith.constant 0 : i32
    return %arg0, %c0_i32, %c0_i32_0 : i32, i32, i32
  }
  func.func @transform_7(%arg0: i32) -> (i32, i32, i32) {
    %c0_i32 = arith.constant 0 : i32
    %c0_i32_0 = arith.constant 0 : i32
    %c0_i32_1 = arith.constant 0 : i32
    return %arg0, %c0_i32, %c0_i32_0 : i32, i32, i32
  }
  func.func @transform_8(%arg0: i32) -> (i32, i32, i32) {
    %c0_i32 = arith.constant 0 : i32
    %c0_i32_0 = arith.constant 0 : i32
    %c0_i32_1 = arith.constant 0 : i32
    return %arg0, %c0_i32, %c0_i32_0 : i32, i32, i32
  }
  func.func @transform_9(%arg0: i32) -> (i32, i32, i32) {
    %c0_i32 = arith.constant 0 : i32
    %c0_i32_0 = arith.constant 0 : i32
    %c0_i32_1 = arith.constant 0 : i32
    return %arg0, %c0_i32, %c0_i32_0 : i32, i32, i32
  }
}

module attributes {stable_mosaic.version = 11 : i64} {
  func.func @_stage2_kernel(%arg0: i32, %arg1: memref<1x4x4xf32, #tpu.memory_space<vmem>>, %arg2: memref<1x4x32xf32, #tpu.memory_space<vmem>>, %arg3: memref<32x32xf32, #tpu.memory_space<vmem>>, %arg4: memref<32x2xf32, #tpu.memory_space<vmem>>, %arg5: memref<2x32x64xf32, #tpu.memory_space<vmem>>, %arg6: memref<1x64xf32, #tpu.memory_space<vmem>>, %arg7: memref<64x2xf32, #tpu.memory_space<vmem>>, %arg8: memref<1x2xf32, #tpu.memory_space<vmem>>, %arg9: memref<64x1xf32, #tpu.memory_space<vmem>>, %arg10: memref<1x1xf32, #tpu.memory_space<vmem>>, %arg11: memref<1x1x1xf32, #tpu.memory_space<vmem>>, %arg12: memref<1x1x2xf32, #tpu.memory_space<vmem>>, %arg13: memref<1x1x1xf32, #tpu.memory_space<vmem>>, %arg14: memref<1x1x1xf32, #tpu.memory_space<vmem>>) attributes {dimension_semantics = [#tpu.dimension_semantics<parallel>], iteration_bounds = array<i64: 2>, scalar_prefetch = 0 : i64, scratch_operands = 0 : i64, tpu.core_type = #tpu.core_type<tc>, window_params = [{transform_indices = @transform_0, window_bounds = array<i64: 1, 4, 4>}, {transform_indices = @transform_1, window_bounds = array<i64: 1, 4, 32>}, {pipeline_mode = #tpu.pipeline_mode<synchronous>, transform_indices = @transform_2, window_bounds = array<i64: 32, 32>}, {pipeline_mode = #tpu.pipeline_mode<synchronous>, transform_indices = @transform_3, window_bounds = array<i64: 32, 2>}, {pipeline_mode = #tpu.pipeline_mode<synchronous>, transform_indices = @transform_4, window_bounds = array<i64: 2, 32, 64>}, {pipeline_mode = #tpu.pipeline_mode<synchronous>, transform_indices = @transform_5, window_bounds = array<i64: 1, 64>}, {pipeline_mode = #tpu.pipeline_mode<synchronous>, transform_indices = @transform_6, window_bounds = array<i64: 64, 2>}, {pipeline_mode = #tpu.pipeline_mode<synchronous>, transform_indices = @transform_7, window_bounds = array<i64: 1, 2>}, {pipeline_mode = #tpu.pipeline_mode<synchronous>, transform_indices = @transform_8, window_bounds = array<i64: 64, 1>}, {pipeline_mode = #tpu.pipeline_mode<synchronous>, transform_indices = @transform_9, window_bounds = array<i64: 1, 1>}, {transform_indices = @transform_10, window_bounds = array<i64: 1, 1, 1>}, {transform_indices = @transform_11, window_bounds = array<i64: 1, 1, 2>}, {transform_indices = @transform_12, window_bounds = array<i64: 1, 1, 1>}, {transform_indices = @transform_13, window_bounds = array<i64: 1, 1, 1>}]} {
    %c0 = arith.constant 0 : index
    %c0_0 = arith.constant 0 : index
    %c0_1 = arith.constant 0 : index
    %0 = vector.load %arg1[%c0, %c0_0, %c0_1] : memref<1x4x4xf32, #tpu.memory_space<vmem>>, vector<1x4x4xf32>
    %1 = vector.shape_cast %0 : vector<1x4x4xf32> to vector<4x4xf32>
    %c0_2 = arith.constant 0 : index
    %c0_3 = arith.constant 0 : index
    %c0_4 = arith.constant 0 : index
    %2 = vector.load %arg2[%c0_2, %c0_3, %c0_4] : memref<1x4x32xf32, #tpu.memory_space<vmem>>, vector<1x4x32xf32>
    %3 = vector.shape_cast %2 : vector<1x4x32xf32> to vector<4x32xf32>
    %cst = arith.constant dense<0.000000e+00> : vector<4x32xf32>
    %4 = tpu.matmul %1, %3, %cst {dimension_numbers = #tpu.dot_dimension_numbers<[1], [0], [0], [1], [0, 0, 1, 1], [], []>} : vector<4x4xf32>, vector<4x32xf32>, vector<4x32xf32> -> vector<4x32xf32>
    %c0_5 = arith.constant 0 : index
    %c0_6 = arith.constant 0 : index
    %5 = vector.load %arg3[%c0_5, %c0_6] : memref<32x32xf32, #tpu.memory_space<vmem>>, vector<32x32xf32>
    %cst_7 = arith.constant dense<0.000000e+00> : vector<4x32xf32>
    %6 = tpu.matmul %4, %5, %cst_7 {dimension_numbers = #tpu.dot_dimension_numbers<[1], [0], [0], [1], [0, 0, 1, 1], [], []>} : vector<4x32xf32>, vector<32x32xf32>, vector<4x32xf32> -> vector<4x32xf32>
    %cst_8 = arith.constant 0.000000e+00 : f32
    %7 = vector.broadcast %cst_8 : f32 to vector<4x32xf32>
    %8 = arith.maximumf %6, %7 : vector<4x32xf32>
    %c0_9 = arith.constant 0 : index
    %c0_10 = arith.constant 0 : index
    %9 = vector.load %arg4[%c0_9, %c0_10] : memref<32x2xf32, #tpu.memory_space<vmem>>, vector<32x2xf32>
    %cst_11 = arith.constant dense<0.000000e+00> : vector<4x2xf32>
    %10 = tpu.matmul %4, %9, %cst_11 {dimension_numbers = #tpu.dot_dimension_numbers<[1], [0], [0], [1], [0, 0, 1, 1], [], []>} : vector<4x32xf32>, vector<32x2xf32>, vector<4x2xf32> -> vector<4x2xf32>
    %cst_12 = arith.constant dense<0xFF800000> : vector<4xf32>
    %11 = vector.multi_reduction <maximumf>, %10, %cst_12 [1] : vector<4x2xf32> to vector<4xf32>
    %12 = vector.shape_cast %11 : vector<4xf32> to vector<4x1xf32>
    %13 = vector.broadcast %12 : vector<4x1xf32> to vector<4x2xf32>
    %14 = arith.subf %10, %13 : vector<4x2xf32>
    %15 = math.exp %14 : vector<4x2xf32>
    %cst_13 = arith.constant dense<0.000000e+00> : vector<4xf32>
    %16 = vector.multi_reduction <add>, %15, %cst_13 [1] : vector<4x2xf32> to vector<4xf32>
    %17 = vector.shape_cast %16 : vector<4xf32> to vector<4x1xf32>
    %18 = vector.broadcast %17 : vector<4x1xf32> to vector<4x2xf32>
    %19 = arith.divf %15, %18 : vector<4x2xf32>
    %cst_14 = arith.constant dense<0.000000e+00> : vector<2x32xf32>
    %20 = tpu.matmul %19, %8, %cst_14 {dimension_numbers = #tpu.dot_dimension_numbers<[0], [0], [1], [1], [0, 1, 1, 1], [], []>} : vector<4x2xf32>, vector<4x32xf32>, vector<2x32xf32> -> vector<2x32xf32>
    %cst_15 = arith.constant dense<0.000000e+00> : vector<4x4xf32>
    %21 = tpu.matmul %19, %19, %cst_15 {dimension_numbers = #tpu.dot_dimension_numbers<[1], [1], [0], [0], [0, 0, 1, 0], [], []>} : vector<4x2xf32>, vector<4x2xf32>, vector<4x4xf32> -> vector<4x4xf32>
    %22 = arith.subf %1, %21 : vector<4x4xf32>
    %23 = arith.mulf %22, %22 : vector<4x4xf32>
    %cst_16 = arith.constant dense<0.000000e+00> : vector<4xf32>
    %24 = vector.multi_reduction <add>, %23, %cst_16 [1] : vector<4x4xf32> to vector<4xf32>
    %25 = vector.shape_cast %24 : vector<4xf32> to vector<4x1xf32>
    %cst_17 = arith.constant dense<0.000000e+00> : vector<1xf32>
    %26 = vector.multi_reduction <add>, %25, %cst_17 [0] : vector<4x1xf32> to vector<1xf32>
    %27 = vector.shape_cast %26 : vector<1xf32> to vector<1x1xf32>
    %cst_18 = arith.constant 9.99999996E-13 : f32
    %28 = vector.broadcast %cst_18 : f32 to vector<1x1xf32>
    %29 = arith.addf %27, %28 : vector<1x1xf32>
    %30 = math.sqrt %29 : vector<1x1xf32>
    %c0_19 = arith.constant 0 : index
    %c0_20 = arith.constant 0 : index
    %c0_21 = arith.constant 0 : index
    %31 = vector.load %arg13[%c0_19, %c0_20, %c0_21] : memref<1x1x1xf32, #tpu.memory_space<vmem>>, vector<1x1x1xf32>
    %32 = vector.shape_cast %31 : vector<1x1x1xf32> to vector<1x1xf32>
    %33 = vector.shape_cast %30 : vector<1x1xf32> to vector<1x1x1xf32>
    tpu.vector_store %arg13[%c0_19, %c0_20, %c0_21], %33 {strides = array<i32>} : memref<1x1x1xf32, #tpu.memory_space<vmem>>, vector<1x1x1xf32>,
    %cst_22 = arith.constant 9.99999996E-13 : f32
    %34 = vector.broadcast %cst_22 : f32 to vector<4x2xf32>
    %35 = arith.addf %19, %34 : vector<4x2xf32>
    %36 = math.log %35 : vector<4x2xf32>
    %37 = arith.mulf %19, %36 : vector<4x2xf32>
    %cst_23 = arith.constant dense<0.000000e+00> : vector<4xf32>
    %38 = vector.multi_reduction <add>, %37, %cst_23 [1] : vector<4x2xf32> to vector<4xf32>
    %39 = vector.shape_cast %38 : vector<4xf32> to vector<4x1xf32>
    %cst_24 = arith.constant dense<0.000000e+00> : vector<1xf32>
    %40 = vector.multi_reduction <add>, %39, %cst_24 [0] : vector<4x1xf32> to vector<1xf32>
    %41 = vector.shape_cast %40 : vector<1xf32> to vector<1x1xf32>
    %cst_25 = arith.constant 0.000000e+00 : f32
    %42 = vector.broadcast %cst_25 : f32 to vector<1x1xf32>
    %43 = arith.subf %42, %41 : vector<1x1xf32>
    %c0_26 = arith.constant 0 : index
    %c0_27 = arith.constant 0 : index
    %c0_28 = arith.constant 0 : index
    %44 = vector.load %arg14[%c0_26, %c0_27, %c0_28] : memref<1x1x1xf32, #tpu.memory_space<vmem>>, vector<1x1x1xf32>
    %45 = vector.shape_cast %44 : vector<1x1x1xf32> to vector<1x1xf32>
    %46 = vector.shape_cast %43 : vector<1x1xf32> to vector<1x1x1xf32>
    tpu.vector_store %arg14[%c0_26, %c0_27, %c0_28], %46 {strides = array<i32>} : memref<1x1x1xf32, #tpu.memory_space<vmem>>, vector<1x1x1xf32>,
    %c0_29 = arith.constant 0 : index
    %c0_30 = arith.constant 0 : index
    %47 = vector.load %arg6[%c0_29, %c0_30] : memref<1x64xf32, #tpu.memory_space<vmem>>, vector<1x64xf32>
    %48 = vector.extract_strided_slice %20 {offsets = [0, 0], sizes = [1, 32], strides = [1, 1]} : vector<2x32xf32> to vector<1x32xf32>
    %c0_31 = arith.constant 0 : index
    %c0_32 = arith.constant 0 : index
    %c0_33 = arith.constant 0 : index
    %49 = vector.load %arg5[%c0_31, %c0_32, %c0_33] : memref<2x32x64xf32, #tpu.memory_space<vmem>>, vector<1x32x64xf32>
    %50 = vector.shape_cast %49 : vector<1x32x64xf32> to vector<32x64xf32>
    %cst_34 = arith.constant dense<0.000000e+00> : vector<1x64xf32>
    %51 = tpu.matmul %48, %50, %cst_34 {dimension_numbers = #tpu.dot_dimension_numbers<[1], [0], [0], [1], [0, 0, 1, 1], [], []>} : vector<1x32xf32>, vector<32x64xf32>, vector<1x64xf32> -> vector<1x64xf32>
    %52 = arith.addf %47, %51 : vector<1x64xf32>
    %53 = vector.extract_strided_slice %20 {offsets = [1, 0], sizes = [1, 32], strides = [1, 1]} : vector<2x32xf32> to vector<1x32xf32>
    %c1 = arith.constant 1 : index
    %c0_35 = arith.constant 0 : index
    %c0_36 = arith.constant 0 : index
    %54 = vector.load %arg5[%c1, %c0_35, %c0_36] : memref<2x32x64xf32, #tpu.memory_space<vmem>>, vector<1x32x64xf32>
    %55 = vector.shape_cast %54 : vector<1x32x64xf32> to vector<32x64xf32>
    %cst_37 = arith.constant dense<0.000000e+00> : vector<1x64xf32>
    %56 = tpu.matmul %53, %55, %cst_37 {dimension_numbers = #tpu.dot_dimension_numbers<[1], [0], [0], [1], [0, 0, 1, 1], [], []>} : vector<1x32xf32>, vector<32x64xf32>, vector<1x64xf32> -> vector<1x64xf32>
    %57 = arith.addf %52, %56 : vector<1x64xf32>
    %cst_38 = arith.constant 0.000000e+00 : f32
    %58 = vector.broadcast %cst_38 : f32 to vector<1x64xf32>
    %59 = arith.maximumf %57, %58 : vector<1x64xf32>
    %c0_39 = arith.constant 0 : index
    %c0_40 = arith.constant 0 : index
    %60 = vector.load %arg7[%c0_39, %c0_40] : memref<64x2xf32, #tpu.memory_space<vmem>>, vector<64x2xf32>
    %cst_41 = arith.constant dense<0.000000e+00> : vector<1x2xf32>
    %61 = tpu.matmul %59, %60, %cst_41 {dimension_numbers = #tpu.dot_dimension_numbers<[1], [0], [0], [1], [0, 0, 1, 1], [], []>} : vector<1x64xf32>, vector<64x2xf32>, vector<1x2xf32> -> vector<1x2xf32>
    %c0_42 = arith.constant 0 : index
    %c0_43 = arith.constant 0 : index
    %62 = vector.load %arg8[%c0_42, %c0_43] : memref<1x2xf32, #tpu.memory_space<vmem>>, vector<1x2xf32>
    %63 = arith.addf %61, %62 : vector<1x2xf32>
    %c0_44 = arith.constant 0 : index
    %c0_45 = arith.constant 0 : index
    %c0_46 = arith.constant 0 : index
    %64 = vector.load %arg12[%c0_44, %c0_45, %c0_46] : memref<1x1x2xf32, #tpu.memory_space<vmem>>, vector<1x1x2xf32>
    %65 = vector.shape_cast %64 : vector<1x1x2xf32> to vector<1x2xf32>
    %66 = vector.shape_cast %63 : vector<1x2xf32> to vector<1x1x2xf32>
    tpu.vector_store %arg12[%c0_44, %c0_45, %c0_46], %66 {strides = array<i32>} : memref<1x1x2xf32, #tpu.memory_space<vmem>>, vector<1x1x2xf32>,
    %c0_47 = arith.constant 0 : index
    %c0_48 = arith.constant 0 : index
    %67 = vector.load %arg9[%c0_47, %c0_48] : memref<64x1xf32, #tpu.memory_space<vmem>>, vector<64x1xf32>
    %cst_49 = arith.constant dense<0.000000e+00> : vector<1x1xf32>
    %68 = tpu.matmul %59, %67, %cst_49 {dimension_numbers = #tpu.dot_dimension_numbers<[1], [0], [0], [1], [0, 0, 1, 1], [], []>} : vector<1x64xf32>, vector<64x1xf32>, vector<1x1xf32> -> vector<1x1xf32>
    %c0_50 = arith.constant 0 : index
    %c0_51 = arith.constant 0 : index
    %69 = vector.load %arg10[%c0_50, %c0_51] : memref<1x1xf32, #tpu.memory_space<vmem>>, vector<1x1xf32>
    %70 = arith.addf %68, %69 : vector<1x1xf32>
    %c0_52 = arith.constant 0 : index
    %c0_53 = arith.constant 0 : index
    %c0_54 = arith.constant 0 : index
    %71 = vector.load %arg11[%c0_52, %c0_53, %c0_54] : memref<1x1x1xf32, #tpu.memory_space<vmem>>, vector<1x1x1xf32>
    %72 = vector.shape_cast %71 : vector<1x1x1xf32> to vector<1x1xf32>
    %73 = vector.shape_cast %70 : vector<1x1xf32> to vector<1x1x1xf32>
    tpu.vector_store %arg11[%c0_52, %c0_53, %c0_54], %73 {strides = array<i32>} : memref<1x1x1xf32, #tpu.memory_space<vmem>>, vector<1x1x1xf32>,
    return
  }
  func.func @transform_0(%arg0: i32) -> (i32, i32, i32) {
    %c0_i32 = arith.constant 0 : i32
    %c0_i32_0 = arith.constant 0 : i32
    %c0_i32_1 = arith.constant 0 : i32
    return %arg0, %c0_i32, %c0_i32_0 : i32, i32, i32
  }
  func.func @transform_1(%arg0: i32) -> (i32, i32, i32) {
    %c0_i32 = arith.constant 0 : i32
    %c0_i32_0 = arith.constant 0 : i32
    %c0_i32_1 = arith.constant 0 : i32
    return %arg0, %c0_i32, %c0_i32_0 : i32, i32, i32
  }
  func.func @transform_2(%arg0: i32) -> (i32, i32) {
    %c0_i32 = arith.constant 0 : i32
    %c0_i32_0 = arith.constant 0 : i32
    %c0_i32_1 = arith.constant 0 : i32
    return %c0_i32, %c0_i32_0 : i32, i32
  }
  func.func @transform_3(%arg0: i32) -> (i32, i32) {
    %c0_i32 = arith.constant 0 : i32
    %c0_i32_0 = arith.constant 0 : i32
    %c0_i32_1 = arith.constant 0 : i32
    return %c0_i32, %c0_i32_0 : i32, i32
  }
  func.func @transform_4(%arg0: i32) -> (i32, i32, i32) {
    %c0_i32 = arith.constant 0 : i32
    %c0_i32_0 = arith.constant 0 : i32
    %c0_i32_1 = arith.constant 0 : i32
    %c0_i32_2 = arith.constant 0 : i32
    return %c0_i32, %c0_i32_0, %c0_i32_1 : i32, i32, i32
  }
  func.func @transform_5(%arg0: i32) -> (i32, i32) {
    %c0_i32 = arith.constant 0 : i32
    %c0_i32_0 = arith.constant 0 : i32
    %c0_i32_1 = arith.constant 0 : i32
    return %c0_i32, %c0_i32_0 : i32, i32
  }
  func.func @transform_6(%arg0: i32) -> (i32, i32) {
    %c0_i32 = arith.constant 0 : i32
    %c0_i32_0 = arith.constant 0 : i32
    %c0_i32_1 = arith.constant 0 : i32
    return %c0_i32, %c0_i32_0 : i32, i32
  }
  func.func @transform_7(%arg0: i32) -> (i32, i32) {
    %c0_i32 = arith.constant 0 : i32
    %c0_i32_0 = arith.constant 0 : i32
    %c0_i32_1 = arith.constant 0 : i32
    return %c0_i32, %c0_i32_0 : i32, i32
  }
  func.func @transform_8(%arg0: i32) -> (i32, i32) {
    %c0_i32 = arith.constant 0 : i32
    %c0_i32_0 = arith.constant 0 : i32
    %c0_i32_1 = arith.constant 0 : i32
    return %c0_i32, %c0_i32_0 : i32, i32
  }
  func.func @transform_9(%arg0: i32) -> (i32, i32) {
    %c0_i32 = arith.constant 0 : i32
    %c0_i32_0 = arith.constant 0 : i32
    %c0_i32_1 = arith.constant 0 : i32
    return %c0_i32, %c0_i32_0 : i32, i32
  }
  func.func @transform_10(%arg0: i32) -> (i32, i32, i32) {
    %c0_i32 = arith.constant 0 : i32
    %c0_i32_0 = arith.constant 0 : i32
    %c0_i32_1 = arith.constant 0 : i32
    return %arg0, %c0_i32, %c0_i32_0 : i32, i32, i32
  }
  func.func @transform_11(%arg0: i32) -> (i32, i32, i32) {
    %c0_i32 = arith.constant 0 : i32
    %c0_i32_0 = arith.constant 0 : i32
    %c0_i32_1 = arith.constant 0 : i32
    return %arg0, %c0_i32, %c0_i32_0 : i32, i32, i32
  }
  func.func @transform_12(%arg0: i32) -> (i32, i32, i32) {
    %c0_i32 = arith.constant 0 : i32
    %c0_i32_0 = arith.constant 0 : i32
    %c0_i32_1 = arith.constant 0 : i32
    return %arg0, %c0_i32, %c0_i32_0 : i32, i32, i32
  }
  func.func @transform_13(%arg0: i32) -> (i32, i32, i32) {
    %c0_i32 = arith.constant 0 : i32
    %c0_i32_0 = arith.constant 0 : i32
    %c0_i32_1 = arith.constant 0 : i32
    return %arg0, %c0_i32, %c0_i32_0 : i32, i32, i32
  }
}

</mosaic_0001>

<llo_original>
// kernel: dipol_dscr_forward.2
$region0: #{dipol_dscr_forward.2}
  #allocation0 [shape = 'u32[]', space=smem, size = 0x4, offset = 0x4, fixed_abs, tag = 'smem constant byte address 0x4 - core index']
  #allocation1 [shape = 'u32[72,128]{1,0:T(1,128)}', space=vmem, size = 0x9000, scoped, tag = 'internal scratch']
  %s0 = inlined_call_operand.hbm [shape: f32[2,3,8,8], index: 0, kind: input, shape index: {}]
  %s1 = inlined_call_operand.vmem [shape: f32[2,8,4], index: 1, kind: input, shape index: {}]
  %s2 = inlined_call_operand.vmem [shape: f32[3,4,32], index: 2, kind: input, shape index: {}]
  %s3 = inlined_call_operand.vmem [shape: f32[4,32], index: 3, kind: input, shape index: {}]
  %s4 = inlined_call_operand.vmem [shape: f32[3,4,4], index: 4, kind: input, shape index: {}]
  %s5 = inlined_call_operand.hbm [shape: f32[4,4], index: 5, kind: input, shape index: {}]
  %s6 = inlined_call_operand.vmem [shape: f32[2,4,32], index: 6, kind: output, shape index: {0}]
  %s7 = inlined_call_operand.vmem [shape: f32[2,4,4], index: 7, kind: output, shape index: {1}]
  %s8 = inlined_call_operand.vmem [shape: f32[2,1,1], index: 8, kind: output, shape index: {2}]
  %s9 = inlined_call_operand.vmem [shape: f32[2,1,1], index: 9, kind: output, shape index: {3}]
  %10 = xla_tuple %s6, %s7, %s8, %s9
  %s11 = sld [smem:[#allocation0]]
  $region89: #{dipol_dscr_forward.2} parent=0
    _
  %s13 = ssub.s32 1, %s11
  %s14 = scalar_select 0, %s13, %s11
  $region1: #{dipol_dscr_forward.2} parent=0
    #allocation2 [shape = 'u8[24576]{0}', space=vmem, size = 0x6000, scoped, tag = 'input window, operand 0']
    #allocation3 [shape = 's32[2]{0}', space=sflag, size = 0x8, scoped, tag = 'scoped memory for dipol_dscr_forward.2']
    #allocation4 [shape = 'u8[2048]{0}', space=vmem, size = 0x800, scoped, tag = 'input window, operand 5, single buffered']
    #allocation5 [shape = 's32[1]{0}', space=sflag, size = 0x4, scoped, tag = 'scoped memory for dipol_dscr_forward.2']
    %15 = vsyncpa [#allocation3], 0
    %s16 = scalar_lea.sflag [#allocation3], 1
    %17 = vsyncpa %s16, 0
    %18 = vsyncpa [#allocation5], 0
    loop: start=0, step=1, limit=4
    $region2: #{dipol_dscr_forward.2} parent=1 // loop_pre_header
      _
    $region3: #{dipol_dscr_forward.2} parent=1 // loop_header
      %s20 = sphi 0, %s24
      %p21 = scmp.ge.s32.totalorder %s20, 4
      %s30 = sphi 0, %s32
      %s33 = sphi 0, %s30
      %s34 = sphi 0, %s33
      %s50 = sphi 0, %s34
      %s56 = sphi 0, %s58
      %s59 = sphi 0, %s56
      %s60 = sphi 0, %s59
      %s76 = sphi 0, %s60
      %s80 = sphi 0, %s80
      %s82 = sphi 0, %s80
      %s83 = sphi 0, %s82
      %s97 = sphi 0, %s83
      %s101 = sphi 0, %s101
      %s103 = sphi 0, %s101
      %s104 = sphi 0, %s103
      %s118 = sphi 0, %s104
      %s122 = sphi 0, %s122
      %s124 = sphi 0, %s122
      %s125 = sphi 0, %s124
      %s139 = sphi 0, %s125
      %s143 = sphi 0, %s143
      %s145 = sphi 0, %s143
      %s146 = sphi 0, %s145
      %s160 = sphi 0, %s146
      %s166 = sphi 0, %s168
      %s169 = sphi 0, %s166
      %s170 = sphi 0, %s169
      %s186 = sphi 0, %s170
      %s192 = sphi 0, %s194
      %s195 = sphi 0, %s192
      %s196 = sphi 0, %s195
      %s212 = sphi 0, %s196
      %s218 = sphi 0, %s220
      %s221 = sphi 0, %s218
      %s222 = sphi 0, %s221
      %s238 = sphi 0, %s222
      %s244 = sphi 0, %s246
      %s247 = sphi 0, %s244
      %s248 = sphi 0, %s247
      %s264 = sphi 0, %s248
    $region4: #{dipol_dscr_forward.2} parent=1 // loop_header_branch
      %23 = sbr.rel (%p21) target = $region8
    $region5: #{dipol_dscr_forward.2} parent=1 // loop_body
      %s25 = ssub.s32 %s20, 1
      %s26 = ssub.s32 %s20, 2
      %s27 = sadd.s32 %s20, 1
      %s28 = ssub.s32 %s20, %s27
      %p29 = scmp.eq.s32.totalorder %s28, 0
      %s31 = sadd.s32 %s30, 1
      %s32 = scalar_select %p29, %s30, %s31
      %p35 = pneg %p29
      %p36 = scmp.eq.s32.totalorder %s20, 1
      %p37 = por %p35, %p36
      %p38 = scmp.ne.s32.totalorder %s30, %s33
      %p39 = scmp.eq.s32.totalorder %s20, 0
      %p40 = por %p38, %p39
      %p41 = scmp.ne.s32.totalorder %s30, %s33
      %p42 = scmp.eq.s32.totalorder %s25, 1
      %p43 = por %p41, %p42
      %p44 = scmp.ne.s32.totalorder %s33, %s34
      %p45 = scmp.eq.s32.totalorder %s25, 0
      %p46 = por %p44, %p45
      %p47 = scmp.ne.s32.totalorder %s33, %s34
      %p48 = scmp.eq.s32.totalorder %s26, 1
      %p49 = por %p47, %p48
      %p51 = scmp.ne.s32.totalorder %s34, %s50
      %p52 = scmp.eq.s32.totalorder %s26, 0
      %p53 = por %p51, %p52
      %s54 = ssub.s32 %s20, %s27
      %p55 = scmp.eq.s32.totalorder %s54, 0
      %s57 = sadd.s32 %s56, 1
      %s58 = scalar_select %p55, %s56, %s57
      %p61 = pneg %p55
      %p62 = scmp.eq.s32.totalorder %s20, 1
      %p63 = por %p61, %p62
      %p64 = scmp.ne.s32.totalorder %s56, %s59
      %p65 = scmp.eq.s32.totalorder %s20, 0
      %p66 = por %p64, %p65
      %p67 = scmp.ne.s32.totalorder %s56, %s59
      %p68 = scmp.eq.s32.totalorder %s25, 1
      %p69 = por %p67, %p68
      %p70 = scmp.ne.s32.totalorder %s59, %s60
      %p71 = scmp.eq.s32.totalorder %s25, 0
      %p72 = por %p70, %p71
      %p73 = scmp.ne.s32.totalorder %s59, %s60
      %p74 = scmp.eq.s32.totalorder %s26, 1
      %p75 = por %p73, %p74
      %p77 = scmp.ne.s32.totalorder %s60, %s76
      %p78 = scmp.eq.s32.totalorder %s26, 0
      %p79 = por %p77, %p78
      %s81 = sadd.s32 %s80, 1
      %p84 = scmp.eq.s32.totalorder %s20, 1
      %p85 = scmp.ne.s32.totalorder %s80, %s82
      %p86 = scmp.eq.s32.totalorder %s20, 0
      %p87 = por %p85, %p86
      %p88 = scmp.ne.s32.totalorder %s80, %s82
      %p89 = scmp.eq.s32.totalorder %s25, 1
      %p90 = por %p88, %p89
      %p91 = scmp.ne.s32.totalorder %s82, %s83
      %p92 = scmp.eq.s32.totalorder %s25, 0
      %p93 = por %p91, %p92
      %p94 = scmp.ne.s32.totalorder %s82, %s83
      %p95 = scmp.eq.s32.totalorder %s26, 1
      %p96 = por %p94, %p95
      %p98 = scmp.ne.s32.totalorder %s83, %s97
      %p99 = scmp.eq.s32.totalorder %s26, 0
      %p100 = por %p98, %p99
      %s102 = sadd.s32 %s101, 1
      %p105 = scmp.eq.s32.totalorder %s20, 1
      %p106 = scmp.ne.s32.totalorder %s101, %s103
      %p107 = scmp.eq.s32.totalorder %s20, 0
      %p108 = por %p106, %p107
      %p109 = scmp.ne.s32.totalorder %s101, %s103
      %p110 = scmp.eq.s32.totalorder %s25, 1
      %p111 = por %p109, %p110
      %p112 = scmp.ne.s32.totalorder %s103, %s104
      %p113 = scmp.eq.s32.totalorder %s25, 0
      %p114 = por %p112, %p113
      %p115 = scmp.ne.s32.totalorder %s103, %s104
      %p116 = scmp.eq.s32.totalorder %s26, 1
      %p117 = por %p115, %p116
      %p119 = scmp.ne.s32.totalorder %s104, %s118
      %p120 = scmp.eq.s32.totalorder %s26, 0
      %p121 = por %p119, %p120
      %s123 = sadd.s32 %s122, 1
      %p126 = scmp.eq.s32.totalorder %s20, 1
      %p127 = scmp.ne.s32.totalorder %s122, %s124
      %p128 = scmp.eq.s32.totalorder %s20, 0
      %p129 = por %p127, %p128
      %p130 = scmp.ne.s32.totalorder %s122, %s124
      %p131 = scmp.eq.s32.totalorder %s25, 1
      %p132 = por %p130, %p131
      %p133 = scmp.ne.s32.totalorder %s124, %s125
      %p134 = scmp.eq.s32.totalorder %s25, 0
      %p135 = por %p133, %p134
      %p136 = scmp.ne.s32.totalorder %s124, %s125
      %p137 = scmp.eq.s32.totalorder %s26, 1
      %p138 = por %p136, %p137
      %p140 = scmp.ne.s32.totalorder %s125, %s139
      %p141 = scmp.eq.s32.totalorder %s26, 0
      %p142 = por %p140, %p141
      %s144 = sadd.s32 %s143, 1
      %p147 = scmp.eq.s32.totalorder %s20, 1
      %p148 = scmp.ne.s32.totalorder %s143, %s145
      %p149 = scmp.eq.s32.totalorder %s20, 0
      %p150 = por %p148, %p149
      %p151 = scmp.ne.s32.totalorder %s143, %s145
      %p152 = scmp.eq.s32.totalorder %s25, 1
      %p153 = por %p151, %p152
      %p154 = scmp.ne.s32.totalorder %s145, %s146
      %p155 = scmp.eq.s32.totalorder %s25, 0
      %p156 = por %p154, %p155
      %p157 = scmp.ne.s32.totalorder %s145, %s146
      %p158 = scmp.eq.s32.totalorder %s26, 1
      %p159 = por %p157, %p158
      %p161 = scmp.ne.s32.totalorder %s146, %s160
      %p162 = scmp.eq.s32.totalorder %s26, 0
      %p163 = por %p161, %p162
      %s164 = ssub.s32 %s20, %s27
      %p165 = scmp.eq.s32.totalorder %s164, 0
      %s167 = sadd.s32 %s166, 1
      %s168 = scalar_select %p165, %s166, %s167
      %p171 = pneg %p165
      %p172 = scmp.eq.s32.totalorder %s20, 1
      %p173 = por %p171, %p172
      %p174 = scmp.ne.s32.totalorder %s166, %s169
      %p175 = scmp.eq.s32.totalorder %s20, 0
      %p176 = por %p174, %p175
      %p177 = scmp.ne.s32.totalorder %s166, %s169
      %p178 = scmp.eq.s32.totalorder %s25, 1
      %p179 = por %p177, %p178
      %p180 = scmp.ne.s32.totalorder %s169, %s170
      %p181 = scmp.eq.s32.totalorder %s25, 0
      %p182 = por %p180, %p181
      %p183 = scmp.ne.s32.totalorder %s169, %s170
      %p184 = scmp.eq.s32.totalorder %s26, 1
      %p185 = por %p183, %p184
      %p187 = scmp.ne.s32.totalorder %s170, %s186
      %p188 = scmp.eq.s32.totalorder %s26, 0
      %p189 = por %p187, %p188
      %s190 = ssub.s32 %s20, %s27
      %p191 = scmp.eq.s32.totalorder %s190, 0
      %s193 = sadd.s32 %s192, 1
      %s194 = scalar_select %p191, %s192, %s193
      %p197 = pneg %p191
      %p198 = scmp.eq.s32.totalorder %s20, 1
      %p199 = por %p197, %p198
      %p200 = scmp.ne.s32.totalorder %s192, %s195
      %p201 = scmp.eq.s32.totalorder %s20, 0
      %p202 = por %p200, %p201
      %p203 = scmp.ne.s32.totalorder %s192, %s195
      %p204 = scmp.eq.s32.totalorder %s25, 1
      %p205 = por %p203, %p204
      %p206 = scmp.ne.s32.totalorder %s195, %s196
      %p207 = scmp.eq.s32.totalorder %s25, 0
      %p208 = por %p206, %p207
      %p209 = scmp.ne.s32.totalorder %s195, %s196
      %p210 = scmp.eq.s32.totalorder %s26, 1
      %p211 = por %p209, %p210
      %p213 = scmp.ne.s32.totalorder %s196, %s212
      %p214 = scmp.eq.s32.totalorder %s26, 0
      %p215 = por %p213, %p214
      %s216 = ssub.s32 %s20, %s27
      %p217 = scmp.eq.s32.totalorder %s216, 0
      %s219 = sadd.s32 %s218, 1
      %s220 = scalar_select %p217, %s218, %s219
      %p223 = pneg %p217
      %p224 = scmp.eq.s32.totalorder %s20, 1
      %p225 = por %p223, %p224
      %p226 = scmp.ne.s32.totalorder %s218, %s221
      %p227 = scmp.eq.s32.totalorder %s20, 0
      %p228 = por %p226, %p227
      %p229 = scmp.ne.s32.totalorder %s218, %s221
      %p230 = scmp.eq.s32.totalorder %s25, 1
      %p231 = por %p229, %p230
      %p232 = scmp.ne.s32.totalorder %s221, %s222
      %p233 = scmp.eq.s32.totalorder %s25, 0
      %p234 = por %p232, %p233
      %p235 = scmp.ne.s32.totalorder %s221, %s222
      %p236 = scmp.eq.s32.totalorder %s26, 1
      %p237 = por %p235, %p236
      %p239 = scmp.ne.s32.totalorder %s222, %s238
      %p240 = scmp.eq.s32.totalorder %s26, 0
      %p241 = por %p239, %p240
      %s242 = ssub.s32 %s20, %s27
      %p243 = scmp.eq.s32.totalorder %s242, 0
      %s245 = sadd.s32 %s244, 1
      %s246 = scalar_select %p243, %s244, %s245
      %p249 = pneg %p243
      %p250 = scmp.eq.s32.totalorder %s20, 1
      %p251 = por %p249, %p250
      %p252 = scmp.ne.s32.totalorder %s244, %s247
      %p253 = scmp.eq.s32.totalorder %s20, 0
      %p254 = por %p252, %p253
      %p255 = scmp.ne.s32.totalorder %s244, %s247
      %p256 = scmp.eq.s32.totalorder %s25, 1
      %p257 = por %p255, %p256
      %p258 = scmp.ne.s32.totalorder %s247, %s248
      %p259 = scmp.eq.s32.totalorder %s25, 0
      %p260 = por %p258, %p259
      %p261 = scmp.ne.s32.totalorder %s247, %s248
      %p262 = scmp.eq.s32.totalorder %s26, 1
      %p263 = por %p261, %p262
      %p265 = scmp.ne.s32.totalorder %s248, %s264
      %p266 = scmp.eq.s32.totalorder %s26, 0
      %p267 = por %p265, %p266
      %p268 = scmp.le.s32.totalorder 1, %s20
      %p269 = scmp.lt.s32.totalorder %s20, 3
      %p270 = pnand %p268, %p269
      %p271 = pneg %p270
      // Predicated region
      $region9: #{dipol_dscr_forward.2} parent=5 // pred_check
        _
      $region10: #{dipol_dscr_forward.2} parent=5 // pred_check_branch
        %273 = sbr.rel (%p270) target = $region12
      $region11: #{dipol_dscr_forward.2} parent=5 // pred_region
        %s274 = ssub.s32 %s20, 1
        // Predicated region
        $region13: #{dipol_dscr_forward.2} parent=11 // pred_check
          %p275 = pneg %p93
        $region14: #{dipol_dscr_forward.2} parent=11 // pred_check_branch
          %277 = sbr.rel (%p275) target = $region16
        $region15: #{dipol_dscr_forward.2} parent=11 // pred_region
          _
        $region16: #{dipol_dscr_forward.2} parent=11 // pred_fallthru
          _
        // Predicated region
        $region17: #{dipol_dscr_forward.2} parent=11 // pred_check
          %p278 = pneg %p114
        $region18: #{dipol_dscr_forward.2} parent=11 // pred_check_branch
          %280 = sbr.rel (%p278) target = $region20
        $region19: #{dipol_dscr_forward.2} parent=11 // pred_region
          _
        $region20: #{dipol_dscr_forward.2} parent=11 // pred_fallthru
          _
        // Predicated region
        $region21: #{dipol_dscr_forward.2} parent=11 // pred_check
          %p281 = pneg %p135
        $region22: #{dipol_dscr_forward.2} parent=11 // pred_check_branch
          %283 = sbr.rel (%p281) target = $region24
        $region23: #{dipol_dscr_forward.2} parent=11 // pred_region
          _
        $region24: #{dipol_dscr_forward.2} parent=11 // pred_fallthru
          _
        // Predicated region
        $region25: #{dipol_dscr_forward.2} parent=11 // pred_check
          %p284 = pneg %p156
        $region26: #{dipol_dscr_forward.2} parent=11 // pred_check_branch
          %286 = sbr.rel (%p284) target = $region28
        $region27: #{dipol_dscr_forward.2} parent=11 // pred_region
          %288 = vsyncadd [#allocation5], 0
          %s290 = sshll.u32 %s5, 4
          %s291 = int_to_ptr.hbm [resolvable:$true] %s290
          %s292 = sshll.u32 [#allocation4], 4
          %s293 = int_to_ptr.vmem [resolvable:$true] %s292
          %295 = dma.hbm_to_vmem [thread:$0]  %s291, 64, %s293, [#allocation5]
        $region28: #{dipol_dscr_forward.2} parent=11 // pred_fallthru
          _
      $region12: #{dipol_dscr_forward.2} parent=5 // pred_fallthru
        _
      %p296 = scmp.lt.s32.totalorder %s20, 2
      // Predicated region
      $region29: #{dipol_dscr_forward.2} parent=5 // pred_check
        %p297 = pneg %p296
      $region30: #{dipol_dscr_forward.2} parent=5 // pred_check_branch
        %299 = sbr.rel (%p297) target = $region32
      $region31: #{dipol_dscr_forward.2} parent=5 // pred_region
        // Predicated region
        $region33: #{dipol_dscr_forward.2} parent=31 // pred_check
          %p300 = pneg %p40
        $region34: #{dipol_dscr_forward.2} parent=31 // pred_check_branch
          %302 = sbr.rel (%p300) target = $region36
        $region35: #{dipol_dscr_forward.2} parent=31 // pred_region
          %s303 = sand.u32 %s30, 1
          %s304 = scalar_lea.sflag [#allocation3], %s303
          %s305 = sand.u32 %s30, 1
          %s306 = smul.addr %s305, 24
          %s307 = scalar_lea.vmem [#allocation2], %s306
          %309 = vsyncadd %s304, 0
          %s310 = smul.addr %s20, 3
          %s311 = smul.addr %s310, 8
          %s312 = scalar_lea.hbm %s0, %s311
          %s313 = sshll.u32 %s312, 4
          %s314 = int_to_ptr.hbm [resolvable:$true] %s313
          %s315 = sshll.u32 %s307, 4
          %s316 = int_to_ptr.vmem [resolvable:$true] %s315
          %321 = dma.hbm_to_vmem [thread:$0]  %s314, 384, %s316, %s304, 128, 128, 8
        $region36: #{dipol_dscr_forward.2} parent=31 // pred_fallthru
          _
        // Predicated region
        $region37: #{dipol_dscr_forward.2} parent=31 // pred_check
          %p322 = pneg %p66
        $region38: #{dipol_dscr_forward.2} parent=31 // pred_check_branch
          %324 = sbr.rel (%p322) target = $region40
        $region39: #{dipol_dscr_forward.2} parent=31 // pred_region
          %p325 = scmp.lt.s32.totalorder %s20, 1
          %s326 = scalar_select %p325, %s20, 1
          %s327 = smul.addr %s326, 8
          %s328 = scalar_lea.vmem %s1, %s327
        $region40: #{dipol_dscr_forward.2} parent=31 // pred_fallthru
          _
      $region32: #{dipol_dscr_forward.2} parent=5 // pred_fallthru
        _
      %p329 = scmp.le.s32.totalorder 1, %s20
      %p330 = scmp.lt.s32.totalorder %s20, 3
      %p331 = pnand %p329, %p330
      %p332 = pneg %p331
      // Predicated region
      $region41: #{dipol_dscr_forward.2} parent=5 // pred_check
        _
      $region42: #{dipol_dscr_forward.2} parent=5 // pred_check_branch
        %334 = sbr.rel (%p331) target = $region44
      $region43: #{dipol_dscr_forward.2} parent=5 // pred_region
        %s335 = ssub.s32 %s20, 1
        %s336 = sand.u32 %s33, 1
        %s337 = scalar_lea.sflag [#allocation3], %s336
        %s338 = sand.u32 %s33, 1
        %s339 = smul.addr %s338, 24
        %s340 = scalar_lea.vmem [#allocation2], %s339
        // Predicated region
        $region45: #{dipol_dscr_forward.2} parent=43 // pred_check
          %p341 = pneg %p46
        $region46: #{dipol_dscr_forward.2} parent=43 // pred_check_branch
          %343 = sbr.rel (%p341) target = $region48
        $region47: #{dipol_dscr_forward.2} parent=43 // pred_region
          %345 = dma.done %s337, 384
        $region48: #{dipol_dscr_forward.2} parent=43 // pred_fallthru
          _
        // Predicated region
        $region49: #{dipol_dscr_forward.2} parent=43 // pred_check
          %p346 = pneg %p156
        $region50: #{dipol_dscr_forward.2} parent=43 // pred_check_branch
          %348 = sbr.rel (%p346) target = $region52
        $region51: #{dipol_dscr_forward.2} parent=43 // pred_region
          %350 = dma.done [#allocation5], 64
        $region52: #{dipol_dscr_forward.2} parent=43 // pred_fallthru
          _
        %s351 = sand.u32 %s33, 1
        %s352 = scalar_lea.sflag [#allocation3], %s351
        %s353 = sand.u32 %s33, 1
        %s354 = smul.addr %s353, 24
        %s355 = scalar_lea.vmem [#allocation2], %s354
        %p356 = pneg %p46
        %p357 = pneg %p43
        %p358 = scmp.lt.s32.totalorder %s25, 1
        %s359 = scalar_select %p358, %s25, 1
        %s360 = smul.addr %s359, 8
        %s361 = scalar_lea.vmem %s1, %s360
        %p362 = pneg %p72
        %p363 = pneg %p69
        %p364 = pneg %p93
        %p365 = pneg %p90
        %p366 = pneg %p114
        %p367 = pneg %p111
        %p368 = pneg %p135
        %p369 = pneg %p132
        %p370 = pneg %p156
        %p371 = pneg %p153
        %p372 = pneg %p182
        %p373 = pneg %p179
        %p374 = scmp.lt.s32.totalorder %s25, 1
        %s375 = scalar_select %p374, %s25, 1
        %s376 = smul.addr %s375, 4
        %s377 = scalar_lea.vmem %s6, %s376
        %p378 = pneg %p208
        %p379 = pneg %p205
        %p380 = scmp.lt.s32.totalorder %s25, 1
        %s381 = scalar_select %p380, %s25, 1
        %s382 = smul.addr %s381, 4
        %s383 = scalar_lea.vmem %s7, %s382
        %p384 = pneg %p234
        %p385 = pneg %p231
        %p386 = scmp.lt.s32.totalorder %s25, 1
        %s387 = scalar_select %p386, %s25, 1
        %s388 = scalar_lea.vmem %s8, %s387
        %p389 = pneg %p260
        %p390 = pneg %p257
        %p391 = scmp.lt.s32.totalorder %s25, 1
        %s392 = scalar_select %p391, %s25, 1
        %s393 = scalar_lea.vmem %s9, %s392
        %p394 = scmp.lt.s32.totalorder %s25, 1
        %s395 = scalar_select %p394, %s25, 1
        %s396 = smul.addr %s395, 8
        %s397 = scalar_lea.vmem %s1, %s396
        %p398 = scmp.lt.s32.totalorder %s25, 1
        %s399 = scalar_select %p398, %s25, 1
        %s400 = smul.addr %s399, 4
        %s401 = scalar_lea.vmem %s6, %s400
        %p402 = scmp.lt.s32.totalorder %s25, 1
        %s403 = scalar_select %p402, %s25, 1
        %s404 = smul.addr %s403, 4
        %s405 = scalar_lea.vmem %s7, %s404
        %p406 = scmp.lt.s32.totalorder %s25, 1
        %s407 = scalar_select %p406, %s25, 1
        %s408 = scalar_lea.vmem %s8, %s407
        %p409 = scmp.lt.s32.totalorder %s25, 1
        %s410 = scalar_select %p409, %s25, 1
        %s411 = scalar_lea.vmem %s9, %s410
        %v412 = vld [vmem:[%s340] sm:$0xff]
        %v413 = vld [vmem:[%s340 + $0x8] sm:$0xff]
        %v414 = vld [vmem:[%s340 + $0x10] sm:$0xff]
        %v415 = vld [vmem:[%s397] sm:$0xff]
        %vm416 = vcmask 64512
        %v418 = vsel %vm416, %v412, 0
        %420 = vmatpush.msra.mxu0 0.0
        %421 = vmatpush.msra.mxu0 0.0
        %422 = vmatpush.msra.mxu0 0.0
        %423 = vmatpush.msra.mxu0 0.0
        %424 = vmatpush.msra.mxu0 0.0
        %425 = vmatpush.msra.mxu0 0.0
        %426 = vmatpush.msra.mxu0 0.0
        %427 = vmatpush.msra.mxu0 0.0
        %428 = vmatpush.msra.mxu0 0.0
        %429 = vmatpush.msra.mxu0 0.0
        %430 = vmatpush.msra.mxu0 0.0
        %431 = vmatpush.msra.mxu0 0.0
        %432 = vmatpush.msra.mxu0 0.0
        %433 = vmatpush.msra.mxu0 0.0
        %434 = vmatpush.msra.mxu0 0.0
        %435 = vmatpush.msra.mxu0 %v415
        %436 = vmatmul.f32.gmra.mxu0 %v418
        %v437 = vpop.f32.mrf.mxu0
        %v438 = vadd.f32 0.0, %v437
        %439 = vdwg.mxu0
        %v440 = vadd.f32 %v412, %v413
        %v442 = vsel %vm416, %v413, 0
        %444 = vmatpush.msra.mxu0 0.0
        %445 = vmatpush.msra.mxu0 0.0
        %446 = vmatpush.msra.mxu0 0.0
        %447 = vmatpush.msra.mxu0 0.0
        %448 = vmatpush.msra.mxu0 0.0
        %449 = vmatpush.msra.mxu0 0.0
        %450 = vmatpush.msra.mxu0 0.0
        %451 = vmatpush.msra.mxu0 0.0
        %452 = vmatpush.msra.mxu0 0.0
        %453 = vmatpush.msra.mxu0 0.0
        %454 = vmatpush.msra.mxu0 0.0
        %455 = vmatpush.msra.mxu0 0.0
        %456 = vmatpush.msra.mxu0 0.0
        %457 = vmatpush.msra.mxu0 0.0
        %458 = vmatpush.msra.mxu0 0.0
        %459 = vmatpush.msra.mxu0 %v415
        %460 = vmatmul.f32.gmra.mxu0 %v442
        %v461 = vpop.f32.mrf.mxu0
        %v462 = vadd.f32 0.0, %v461
        %463 = vdwg.mxu0
        %v464 = vadd.f32 %v440, %v414
        %v466 = vsel %vm416, %v414, 0
        %468 = vmatpush.msra.mxu0 0.0
        %469 = vmatpush.msra.mxu0 0.0
        %470 = vmatpush.msra.mxu0 0.0
        %471 = vmatpush.msra.mxu0 0.0
        %472 = vmatpush.msra.mxu0 0.0
        %473 = vmatpush.msra.mxu0 0.0
        %474 = vmatpush.msra.mxu0 0.0
        %475 = vmatpush.msra.mxu0 0.0
        %476 = vmatpush.msra.mxu0 0.0
        %477 = vmatpush.msra.mxu0 0.0
        %478 = vmatpush.msra.mxu0 0.0
        %479 = vmatpush.msra.mxu0 0.0
        %480 = vmatpush.msra.mxu0 0.0
        %481 = vmatpush.msra.mxu0 0.0
        %482 = vmatpush.msra.mxu0 0.0
        %483 = vmatpush.msra.mxu0 %v415
        %484 = vmatmul.f32.gmra.mxu0 %v466
        %v485 = vpop.f32.mrf.mxu0
        %v486 = vadd.f32 0.0, %v485
        %487 = vdwg.mxu0
        %v488 = vld [vmem:[%s3] sm:$0xf]
        %v489 = vld [vmem:[#allocation4] sm:$0xf]
        %v490 = vld [vmem:[%s2] sm:$0xf]
        %vm491 = vcmask 31744
        %v493 = vsel %vm491, %v438, 0
        %vm495 = vcmask 1043456
        %v497 = vsel %vm495, %v490, 0
        %499 = vmatpush.msra.mxu0 0.0
        %500 = vmatpush.msra.mxu0 0.0
        %501 = vmatpush.msra.mxu0 0.0
        %502 = vmatpush.msra.mxu0 0.0
        %503 = vmatpush.msra.mxu0 0.0
        %504 = vmatpush.msra.mxu0 0.0
        %505 = vmatpush.msra.mxu0 0.0
        %506 = vmatpush.msra.mxu0 0.0
        %507 = vmatpush.msra.mxu0 0.0
        %508 = vmatpush.msra.mxu0 0.0
        %509 = vmatpush.msra.mxu0 0.0
        %510 = vmatpush.msra.mxu0 0.0
        %511 = vmatpush.msra.mxu0 0.0
        %512 = vmatpush.msra.mxu0 0.0
        %513 = vmatpush.msra.mxu0 0.0
        %514 = vmatpush.msra.mxu0 %v497
        %515 = vmatmul.f32.gmra.mxu0 %v493
        %v516 = vpop.f32.mrf.mxu0
        %v517 = vadd.f32 0.0, %v516
        %518 = vdwg.mxu0
        %v520 = vsel %vm491, %v415, 0
        %v523 = vsel %vm495, %v488, 0
        %525 = vmatpush.msra.mxu0 0.0
        %526 = vmatpush.msra.mxu0 0.0
        %527 = vmatpush.msra.mxu0 0.0
        %528 = vmatpush.msra.mxu0 0.0
        %529 = vmatpush.msra.mxu0 0.0
        %530 = vmatpush.msra.mxu0 0.0
        %531 = vmatpush.msra.mxu0 0.0
        %532 = vmatpush.msra.mxu0 0.0
        %533 = vmatpush.msra.mxu0 0.0
        %534 = vmatpush.msra.mxu0 0.0
        %535 = vmatpush.msra.mxu0 0.0
        %536 = vmatpush.msra.mxu0 0.0
        %537 = vmatpush.msra.mxu0 0.0
        %538 = vmatpush.msra.mxu0 0.0
        %539 = vmatpush.msra.mxu0 0.0
        %540 = vmatpush.msra.mxu0 %v523
        %541 = vmatmul.f32.gmra.mxu0 %v520
        %v542 = vpop.f32.mrf.mxu0
        %v543 = vadd.f32 %v517, %v542
        %544 = vdwg.mxu0
        %v545 = vld [vmem:[%s4] sm:$0xf]
        %v547 = vsel %vm495, %v545, 0
        %549 = vmatpush.msra.mxu0 0.0
        %550 = vmatpush.msra.mxu0 0.0
        %551 = vmatpush.msra.mxu0 0.0
        %552 = vmatpush.msra.mxu0 0.0
        %553 = vmatpush.msra.mxu0 0.0
        %554 = vmatpush.msra.mxu0 0.0
        %555 = vmatpush.msra.mxu0 0.0
        %556 = vmatpush.msra.mxu0 0.0
        %557 = vmatpush.msra.mxu0 0.0
        %558 = vmatpush.msra.mxu0 0.0
        %559 = vmatpush.msra.mxu0 0.0
        %560 = vmatpush.msra.mxu0 0.0
        %561 = vmatpush.msra.mxu0 0.0
        %562 = vmatpush.msra.mxu0 0.0
        %563 = vmatpush.msra.mxu0 0.0
        %564 = vmatpush.msra.mxu0 %v547
        %565 = vmatmul.f32.gmra.mxu0 %v493
        %v566 = vpop.f32.mrf.mxu0
        %v567 = vadd.f32 0.0, %v566
        %568 = vdwg.mxu0
        %v570 = vsel %vm495, %v489, 0
        %572 = vmatpush.msra.mxu0 0.0
        %573 = vmatpush.msra.mxu0 0.0
        %574 = vmatpush.msra.mxu0 0.0
        %575 = vmatpush.msra.mxu0 0.0
        %576 = vmatpush.msra.mxu0 0.0
        %577 = vmatpush.msra.mxu0 0.0
        %578 = vmatpush.msra.mxu0 0.0
        %579 = vmatpush.msra.mxu0 0.0
        %580 = vmatpush.msra.mxu0 0.0
        %581 = vmatpush.msra.mxu0 0.0
        %582 = vmatpush.msra.mxu0 0.0
        %583 = vmatpush.msra.mxu0 0.0
        %584 = vmatpush.msra.mxu0 0.0
        %585 = vmatpush.msra.mxu0 0.0
        %586 = vmatpush.msra.mxu0 0.0
        %587 = vmatpush.msra.mxu0 %v570
        %588 = vmatmul.f32.gmra.mxu0 %v520
        %v589 = vpop.f32.mrf.mxu0
        %v590 = vadd.f32 %v567, %v589
        %591 = vdwg.mxu0
        %s592 = scalar_lea.vmem %s2, 4
        %v593 = vld [vmem:[%s592] sm:$0xf]
        %v595 = vsel %vm491, %v462, 0
        %v598 = vsel %vm495, %v593, 0
        %600 = vmatpush.msra.mxu0 0.0
        %601 = vmatpush.msra.mxu0 0.0
        %602 = vmatpush.msra.mxu0 0.0
        %603 = vmatpush.msra.mxu0 0.0
        %604 = vmatpush.msra.mxu0 0.0
        %605 = vmatpush.msra.mxu0 0.0
        %606 = vmatpush.msra.mxu0 0.0
        %607 = vmatpush.msra.mxu0 0.0
        %608 = vmatpush.msra.mxu0 0.0
        %609 = vmatpush.msra.mxu0 0.0
        %610 = vmatpush.msra.mxu0 0.0
        %611 = vmatpush.msra.mxu0 0.0
        %612 = vmatpush.msra.mxu0 0.0
        %613 = vmatpush.msra.mxu0 0.0
        %614 = vmatpush.msra.mxu0 0.0
        %615 = vmatpush.msra.mxu0 %v598
        %616 = vmatmul.f32.gmra.mxu0 %v595
        %v617 = vpop.f32.mrf.mxu0
        %v618 = vadd.f32 0.0, %v617
        %619 = vdwg.mxu0
        %v620 = vadd.f32 %v543, %v618
        %s621 = scalar_lea.vmem %s4, 4
        %v622 = vld [vmem:[%s621] sm:$0xf]
        %v624 = vsel %vm495, %v622, 0
        %626 = vmatpush.msra.mxu0 0.0
        %627 = vmatpush.msra.mxu0 0.0
        %628 = vmatpush.msra.mxu0 0.0
        %629 = vmatpush.msra.mxu0 0.0
        %630 = vmatpush.msra.mxu0 0.0
        %631 = vmatpush.msra.mxu0 0.0
        %632 = vmatpush.msra.mxu0 0.0
        %633 = vmatpush.msra.mxu0 0.0
        %634 = vmatpush.msra.mxu0 0.0
        %635 = vmatpush.msra.mxu0 0.0
        %636 = vmatpush.msra.mxu0 0.0
        %637 = vmatpush.msra.mxu0 0.0
        %638 = vmatpush.msra.mxu0 0.0
        %639 = vmatpush.msra.mxu0 0.0
        %640 = vmatpush.msra.mxu0 0.0
        %641 = vmatpush.msra.mxu0 %v624
        %642 = vmatmul.f32.gmra.mxu0 %v595
        %v643 = vpop.f32.mrf.mxu0
        %v644 = vadd.f32 0.0, %v643
        %645 = vdwg.mxu0
        %v646 = vadd.f32 %v590, %v644
        %s647 = scalar_lea.vmem %s2, 8
        %v648 = vld [vmem:[%s647] sm:$0xf]
        %v650 = vsel %vm491, %v486, 0
        %v653 = vsel %vm495, %v648, 0
        %655 = vmatpush.msra.mxu0 0.0
        %656 = vmatpush.msra.mxu0 0.0
        %657 = vmatpush.msra.mxu0 0.0
        %658 = vmatpush.msra.mxu0 0.0
        %659 = vmatpush.msra.mxu0 0.0
        %660 = vmatpush.msra.mxu0 0.0
        %661 = vmatpush.msra.mxu0 0.0
        %662 = vmatpush.msra.mxu0 0.0
        %663 = vmatpush.msra.mxu0 0.0
        %664 = vmatpush.msra.mxu0 0.0
        %665 = vmatpush.msra.mxu0 0.0
        %666 = vmatpush.msra.mxu0 0.0
        %667 = vmatpush.msra.mxu0 0.0
        %668 = vmatpush.msra.mxu0 0.0
        %669 = vmatpush.msra.mxu0 0.0
        %670 = vmatpush.msra.mxu0 %v653
        %671 = vmatmul.f32.gmra.mxu0 %v650
        %v672 = vpop.f32.mrf.mxu0
        %v673 = vadd.f32 0.0, %v672
        %674 = vdwg.mxu0
        %v675 = vadd.f32 %v620, %v673
        %s676 = scalar_lea.vmem %s4, 8
        %v677 = vld [vmem:[%s676] sm:$0xf]
        %v679 = vsel %vm495, %v677, 0
        %681 = vmatpush.msra.mxu0 0.0
        %682 = vmatpush.msra.mxu0 0.0
        %683 = vmatpush.msra.mxu0 0.0
        %684 = vmatpush.msra.mxu0 0.0
        %685 = vmatpush.msra.mxu0 0.0
        %686 = vmatpush.msra.mxu0 0.0
        %687 = vmatpush.msra.mxu0 0.0
        %688 = vmatpush.msra.mxu0 0.0
        %689 = vmatpush.msra.mxu0 0.0
        %690 = vmatpush.msra.mxu0 0.0
        %691 = vmatpush.msra.mxu0 0.0
        %692 = vmatpush.msra.mxu0 0.0
        %693 = vmatpush.msra.mxu0 0.0
        %694 = vmatpush.msra.mxu0 0.0
        %695 = vmatpush.msra.mxu0 0.0
        %696 = vmatpush.msra.mxu0 %v679
        %697 = vmatmul.f32.gmra.mxu0 %v650
        %v698 = vpop.f32.mrf.mxu0
        %v699 = vadd.f32 0.0, %v698
        %700 = vdwg.mxu0
        %v701 = vadd.f32 %v646, %v699
        %v702 = vmax.f32 %v675, 0.0
        %v703 = vsel %vm491, %v701, -inf
        %704 = vmax.xlane.f32.xlu0 %v703
        %v705 = vpop.xlane.xlu0 %704
        %v706 = vsub.f32 %v701, %v705
        %v707 = vmul.f32 %v706, 1.442695
        %v708 = vpow.pop %v707
        %v709 = vsel %vm491, %v708, 0.0
        %710 = vadd.xlane.f32.xlu0 %v709
        %v711 = vpop.xlane.xlu0 %710
        %v712 = vrcp.pop %v711
        %v713 = vmul.f32 %v711, %v712
        %v714 = vsub.f32 1.0, %v713
        %v715 = vmul.f32 %v712, %v714
        %v716 = vadd.f32 %v712, %v715
        %vm717 = vweird.f32 %v711
        %vm718 = vweird.f32 %v712
        %vm719 = vmor %vm717, %vm718
        %v720 = vsel %vm719, %v712, %v716
        %v721 = vand.u32 2147483647, %v711
        %vm722 = vcmp.eq.f32.partialorder %v721, 8.507059e+37
        %v723 = vand.u32 %v711, 2147483648
        %v724 = vor.u32 1.1754944e-38, %v723
        %v725 = vsel %vm722, %v724, %v720
        %v726 = vmul.f32 %v708, %v725
        %727 = vxpose.xlu0.b32.start [1/16] %v726, 128
        %728 = vxpose.xlu0.b32.cont [2/16] 0.0, 128
        %729 = vxpose.xlu0.b32.cont [3/16] 0.0, 128
        %730 = vxpose.xlu0.b32.cont [4/16] 0.0, 128
        %731 = vxpose.xlu0.b32.cont [5/16] 0.0, 128
        %732 = vxpose.xlu0.b32.cont [6/16] 0.0, 128
        %733 = vxpose.xlu0.b32.cont [7/16] 0.0, 128
        %734 = vxpose.xlu0.b32.cont [8/16] 0.0, 128
        %735 = vxpose.xlu0.b32.cont [9/16] 0.0, 128
        %736 = vxpose.xlu0.b32.cont [10/16] 0.0, 128
        %737 = vxpose.xlu0.b32.cont [11/16] 0.0, 128
        %738 = vxpose.xlu0.b32.cont [12/16] 0.0, 128
        %739 = vxpose.xlu0.b32.cont [13/16] 0.0, 128
        %740 = vxpose.xlu0.b32.cont [14/16] 0.0, 128
        %741 = vxpose.xlu0.b32.cont [15/16] 0.0, 128
        %742 = vxpose.xlu0.b32.end [16/16] 0.0, 128
        %v743 = vpop.trf.xlu0
        %v744 = vpop.trf.xlu0
        %v745 = vpop.trf.xlu0
        %v746 = vpop.trf.xlu0
        %v747 = vpop.trf.xlu0
        %v748 = vpop.trf.xlu0
        %v749 = vpop.trf.xlu0
        %v750 = vpop.trf.xlu0
        %v751 = vpop.trf.xlu0
        %v752 = vpop.trf.xlu0
        %v753 = vpop.trf.xlu0
        %v754 = vpop.trf.xlu0
        %v755 = vpop.trf.xlu0
        %v756 = vpop.trf.xlu0
        %v757 = vpop.trf.xlu0
        %v758 = vpop.trf.xlu0
        %v760 = vsel %vm416, %v743, 0
        %762 = vmatpush.msra.mxu0 0.0
        %763 = vmatpush.msra.mxu0 0.0
        %764 = vmatpush.msra.mxu0 0.0
        %765 = vmatpush.msra.mxu0 0.0
        %766 = vmatpush.msra.mxu0 0.0
        %767 = vmatpush.msra.mxu0 0.0
        %768 = vmatpush.msra.mxu0 0.0
        %769 = vmatpush.msra.mxu0 0.0
        %770 = vmatpush.msra.mxu0 0.0
        %771 = vmatpush.msra.mxu0 0.0
        %772 = vmatpush.msra.mxu0 0.0
        %773 = vmatpush.msra.mxu0 0.0
        %774 = vmatpush.msra.mxu0 0.0
        %775 = vmatpush.msra.mxu0 0.0
        %776 = vmatpush.msra.mxu0 0.0
        %777 = vmatpush.msra.mxu0 %v702
        %778 = vmatmul.f32.gmra.mxu0 %v760
        %v779 = vpop.f32.mrf.mxu0
        %v780 = vadd.f32 0.0, %v779
        %781 = vdwg.mxu0
        %vm782 = vcmask 257024
        %783 = vst.msk [vmem:[%s401] sm:$0xf] %vm782, %v780
        %v785 = vsel %vm416, %v464, 0
        %787 = vmatpush.msra.mxu0 0.0
        %788 = vmatpush.msra.mxu0 0.0
        %789 = vmatpush.msra.mxu0 0.0
        %790 = vmatpush.msra.mxu0 0.0
        %791 = vmatpush.msra.mxu0 0.0
        %792 = vmatpush.msra.mxu0 0.0
        %793 = vmatpush.msra.mxu0 0.0
        %794 = vmatpush.msra.mxu0 0.0
        %795 = vmatpush.msra.mxu0 0.0
        %796 = vmatpush.msra.mxu0 0.0
        %797 = vmatpush.msra.mxu0 0.0
        %798 = vmatpush.msra.mxu0 0.0
        %799 = vmatpush.msra.mxu0 0.0
        %800 = vmatpush.msra.mxu0 0.0
        %801 = vmatpush.msra.mxu0 0.0
        %802 = vmatpush.msra.mxu0 %v726
        %803 = vmatmul.f32.gmra.mxu0 %v785
        %v804 = vpop.f32.mrf.mxu0
        %v805 = vadd.f32 0.0, %v804
        %806 = vdwg.mxu0
        %807 = vmatpush.msra.mxu0 0.0
        %808 = vmatpush.msra.mxu0 0.0
        %809 = vmatpush.msra.mxu0 0.0
        %810 = vmatpush.msra.mxu0 0.0
        %811 = vmatpush.msra.mxu0 0.0
        %812 = vmatpush.msra.mxu0 0.0
        %813 = vmatpush.msra.mxu0 0.0
        %814 = vmatpush.msra.mxu0 0.0
        %815 = vmatpush.msra.mxu0 0.0
        %816 = vmatpush.msra.mxu0 0.0
        %817 = vmatpush.msra.mxu0 0.0
        %818 = vmatpush.msra.mxu0 0.0
        %819 = vmatpush.msra.mxu0 0.0
        %820 = vmatpush.msra.mxu0 0.0
        %821 = vmatpush.msra.mxu0 0.0
        %822 = vmatpush.msra.mxu0 %v805
        %823 = vmatmul.f32.gmra.mxu0 %v760
        %v824 = vpop.f32.mrf.mxu0
        %v825 = vadd.f32 0.0, %v824
        %826 = vdwg.mxu0
        %vm827 = vcmask 27648
        %828 = vst.msk [vmem:[%s405] sm:$0xf] %vm827, %v825
        %v830 = vsel %vm491, %v726, 0
        %832 = vmatpush.xpose.msra.mxu0 0.0
        %833 = vmatpush.xpose.msra.mxu0 0.0
        %834 = vmatpush.xpose.msra.mxu0 0.0
        %835 = vmatpush.xpose.msra.mxu0 0.0
        %836 = vmatpush.xpose.msra.mxu0 0.0
        %837 = vmatpush.xpose.msra.mxu0 0.0
        %838 = vmatpush.xpose.msra.mxu0 0.0
        %839 = vmatpush.xpose.msra.mxu0 0.0
        %840 = vmatpush.xpose.msra.mxu0 0.0
        %841 = vmatpush.xpose.msra.mxu0 0.0
        %842 = vmatpush.xpose.msra.mxu0 0.0
        %843 = vmatpush.xpose.msra.mxu0 0.0
        %844 = vmatpush.xpose.msra.mxu0 0.0
        %845 = vmatpush.xpose.msra.mxu0 0.0
        %846 = vmatpush.xpose.msra.mxu0 0.0
        %847 = vmatpush.xpose.msra.mxu0 %v830
        %848 = vmatmul.f32.gmra.mxu0 %v830
        %v849 = vpop.f32.mrf.mxu0
        %v850 = vadd.f32 0.0, %v849
        %851 = vdwg.mxu0
        %v852 = vsub.f32 %v464, %v850
        %v853 = vmul.f32 %v852, %v852
        %v854 = vsel %vm416, %v853, 0.0
        %855 = vadd.xlane.f32.xlu0 %v854
        %v856 = vpop.xlane.xlu0 %855
        %v857 = vrot.slane %v856, 4
        %v858 = vadd.f32 %v856, %v857
        %v859 = vrot.slane %v858, 2
        %v860 = vadd.f32 %v858, %v859
        %v861 = vrot.slane %v860, 1
        %v862 = vadd.f32 %v860, %v861
        %v863 = vadd.f32 %v862, 1e-12
        %v864 = vrsqrt.pop %v863
        %v865 = vmul.f32 %v864, %v863
        %v866 = vmul.f32 %v865, %v864
        %v867 = vmul.f32 0.5, %v866
        %v868 = vsub.f32 1.5, %v867
        %v869 = vmul.f32 %v864, %v868
        %v870 = vmul.f32 %v863, %v869
        %vm871 = vcmp.eq.f32.partialorder %v863, inf
        %v872 = vsel %vm871, %v863, %v870
        %vm873 = vcmp.eq.f32.partialorder %v863, 0.0
        %v874 = vand.u32 %v863, 2147483648
        %v875 = vsel %vm873, %v874, %v872
        %vm876 = vcmask 0
        %877 = vst.msk [vmem:[%s408] sm:$0x1] %vm876, %v875
        %v878 = vadd.f32 %v726, 1e-12
        %v879 = vlog2.pop %v878
        %v880 = vmul.f32 %v879, 0.6931472
        %v881 = vmul.f32 %v726, %v880
        %v882 = vsel %vm491, %v881, 0.0
        %883 = vadd.xlane.f32.xlu0 %v882
        %v884 = vpop.xlane.xlu0 %883
        %v885 = vrot.slane %v884, 4
        %v886 = vadd.f32 %v884, %v885
        %v887 = vrot.slane %v886, 2
        %v888 = vadd.f32 %v886, %v887
        %v889 = vrot.slane %v888, 1
        %v890 = vadd.f32 %v888, %v889
        %v891 = vsub.f32 0.0, %v890
        %892 = vst.msk [vmem:[%s411] sm:$0x1] %vm876, %v891
        %p893 = scmp.lt.s32.totalorder %s25, 1
        %s894 = scalar_select %p893, %s25, 1
        %s895 = smul.addr %s894, 4
        %s896 = scalar_lea.vmem %s6, %s895
        %p897 = scmp.lt.s32.totalorder %s25, 1
        %s898 = scalar_select %p897, %s25, 1
        %s899 = smul.addr %s898, 4
        %s900 = scalar_lea.vmem %s7, %s899
        %p901 = scmp.lt.s32.totalorder %s25, 1
        %s902 = scalar_select %p901, %s25, 1
        %s903 = scalar_lea.vmem %s8, %s902
        %p904 = scmp.lt.s32.totalorder %s25, 1
        %s905 = scalar_select %p904, %s25, 1
        %s906 = scalar_lea.vmem %s9, %s905
        // Predicated region
        $region53: #{dipol_dscr_forward.2} parent=43 // pred_check
          %p907 = pneg %p179
        $region54: #{dipol_dscr_forward.2} parent=43 // pred_check_branch
          %909 = sbr.rel (%p907) target = $region56
        $region55: #{dipol_dscr_forward.2} parent=43 // pred_region
          _
        $region56: #{dipol_dscr_forward.2} parent=43 // pred_fallthru
          _
        // Predicated region
        $region57: #{dipol_dscr_forward.2} parent=43 // pred_check
          %p910 = pneg %p205
        $region58: #{dipol_dscr_forward.2} parent=43 // pred_check_branch
          %912 = sbr.rel (%p910) target = $region60
        $region59: #{dipol_dscr_forward.2} parent=43 // pred_region
          _
        $region60: #{dipol_dscr_forward.2} parent=43 // pred_fallthru
          _
        // Predicated region
        $region61: #{dipol_dscr_forward.2} parent=43 // pred_check
          %p913 = pneg %p231
        $region62: #{dipol_dscr_forward.2} parent=43 // pred_check_branch
          %915 = sbr.rel (%p913) target = $region64
        $region63: #{dipol_dscr_forward.2} parent=43 // pred_region
          _
        $region64: #{dipol_dscr_forward.2} parent=43 // pred_fallthru
          _
        // Predicated region
        $region65: #{dipol_dscr_forward.2} parent=43 // pred_check
          %p916 = pneg %p257
        $region66: #{dipol_dscr_forward.2} parent=43 // pred_check_branch
          %918 = sbr.rel (%p916) target = $region68
        $region67: #{dipol_dscr_forward.2} parent=43 // pred_region
          _
        $region68: #{dipol_dscr_forward.2} parent=43 // pred_fallthru
          _
      $region44: #{dipol_dscr_forward.2} parent=5 // pred_fallthru
        _
      %p919 = scmp.le.s32.totalorder 2, %s20
      // Predicated region
      $region69: #{dipol_dscr_forward.2} parent=5 // pred_check
        %p920 = pneg %p919
      $region70: #{dipol_dscr_forward.2} parent=5 // pred_check_branch
        %922 = sbr.rel (%p920) target = $region72
      $region71: #{dipol_dscr_forward.2} parent=5 // pred_region
        %s923 = ssub.s32 %s20, 2
        // Predicated region
        $region73: #{dipol_dscr_forward.2} parent=71 // pred_check
          %p924 = pneg %p185
        $region74: #{dipol_dscr_forward.2} parent=71 // pred_check_branch
          %926 = sbr.rel (%p924) target = $region76
        $region75: #{dipol_dscr_forward.2} parent=71 // pred_region
          %p927 = scmp.lt.s32.totalorder %s26, 1
          %s928 = scalar_select %p927, %s26, 1
          %s929 = smul.addr %s928, 4
          %s930 = scalar_lea.vmem %s6, %s929
        $region76: #{dipol_dscr_forward.2} parent=71 // pred_fallthru
          _
        // Predicated region
        $region77: #{dipol_dscr_forward.2} parent=71 // pred_check
          %p931 = pneg %p211
        $region78: #{dipol_dscr_forward.2} parent=71 // pred_check_branch
          %933 = sbr.rel (%p931) target = $region80
        $region79: #{dipol_dscr_forward.2} parent=71 // pred_region
          %p934 = scmp.lt.s32.totalorder %s26, 1
          %s935 = scalar_select %p934, %s26, 1
          %s936 = smul.addr %s935, 4
          %s937 = scalar_lea.vmem %s7, %s936
        $region80: #{dipol_dscr_forward.2} parent=71 // pred_fallthru
          _
        // Predicated region
        $region81: #{dipol_dscr_forward.2} parent=71 // pred_check
          %p938 = pneg %p237
        $region82: #{dipol_dscr_forward.2} parent=71 // pred_check_branch
          %940 = sbr.rel (%p938) target = $region84
        $region83: #{dipol_dscr_forward.2} parent=71 // pred_region
          %p941 = scmp.lt.s32.totalorder %s26, 1
          %s942 = scalar_select %p941, %s26, 1
          %s943 = scalar_lea.vmem %s8, %s942
        $region84: #{dipol_dscr_forward.2} parent=71 // pred_fallthru
          _
        // Predicated region
        $region85: #{dipol_dscr_forward.2} parent=71 // pred_check
          %p944 = pneg %p263
        $region86: #{dipol_dscr_forward.2} parent=71 // pred_check_branch
          %946 = sbr.rel (%p944) target = $region88
        $region87: #{dipol_dscr_forward.2} parent=71 // pred_region
          %p947 = scmp.lt.s32.totalorder %s26, 1
          %s948 = scalar_select %p947, %s26, 1
          %s949 = scalar_lea.vmem %s9, %s948
        $region88: #{dipol_dscr_forward.2} parent=71 // pred_fallthru
          _
      $region72: #{dipol_dscr_forward.2} parent=5 // pred_fallthru
        _
    $region6: #{dipol_dscr_forward.2} parent=1 // loop_footer
      %s24 = sadd.s32 1, %s20
    $region7: #{dipol_dscr_forward.2} parent=1 // loop_footer_branch
      %19 = sbr.rel target = $region3
    $region8: #{dipol_dscr_forward.2} parent=1 // loop_exit
      _
    %950 = vsyncpa [#allocation3], 1
    %s951 = scalar_lea.sflag [#allocation3], 1
    %952 = vsyncpa %s951, 1
    %953 = vsyncpa [#allocation5], 1

// kernel: dipol_dscr_forward.3
$region0: #{dipol_dscr_forward.3}
  #allocation0 [shape = 'u32[]', space=smem, size = 0x4, offset = 0x4, fixed_abs, tag = 'smem constant byte address 0x4 - core index']
  #allocation1 [shape = 'u32[72,128]{1,0:T(1,128)}', space=vmem, size = 0x9000, scoped, tag = 'internal scratch']
  #allocation2 [shape = 'f32[1,1]{1,0:T(1,128)S(1)}', space=vmem, size = 0x200, scoped, tag = 'scoped memory for dipol_dscr_forward.3']
  %s0 = inlined_call_operand.vmem [shape: f32[2,4,4], index: 0, kind: input, shape index: {}]
  %s1 = inlined_call_operand.vmem [shape: f32[2,4,32], index: 1, kind: input, shape index: {}]
  %s2 = inlined_call_operand.vmem [shape: f32[32,32], index: 2, kind: input, shape index: {}]
  %s3 = inlined_call_operand.vmem [shape: f32[32,2], index: 3, kind: input, shape index: {}]
  %s4 = inlined_call_operand.vmem [shape: f32[2,32,64], index: 4, kind: input, shape index: {}]
  %s5 = inlined_call_operand.vmem [shape: f32[1,64], index: 5, kind: input, shape index: {}]
  %s6 = inlined_call_operand.vmem [shape: f32[64,2], index: 6, kind: input, shape index: {}]
  %s7 = inlined_call_operand.vmem [shape: f32[1,2], index: 7, kind: input, shape index: {}]
  %s8 = inlined_call_operand.vmem [shape: f32[64,1], index: 8, kind: input, shape index: {}]
  %s9 = inlined_call_operand.<no memory space> [shape: f32[1,1], index: 9, kind: input, shape index: {}]
  %s10 = inlined_call_operand.vmem [shape: f32[2,1,1], index: 10, kind: output, shape index: {0}]
  %s11 = inlined_call_operand.hbm [shape: f32[2,1,2], index: 11, kind: output, shape index: {1}]
  %s12 = inlined_call_operand.vmem [shape: f32[2,1,1], index: 12, kind: output, shape index: {2}]
  %s13 = inlined_call_operand.vmem [shape: f32[2,1,1], index: 13, kind: output, shape index: {3}]
  %14 = xla_tuple %s10, %s11, %s12, %s13
  %s15 = sld [smem:[#allocation0]]
  $region97: #{dipol_dscr_forward.3} parent=0
    _
  %s17 = ssub.s32 1, %s15
  %s18 = scalar_select 0, %s17, %s15
  %v19 = vstv %s9
  %20 = vst [vmem:[#allocation2] sm:$0x1] %v19
  $region1: #{dipol_dscr_forward.3} parent=0
    #allocation3 [shape = 'u8[1024]{0}', space=vmem, size = 0x400, scoped, tag = 'output window, operand 1']
    #allocation4 [shape = 's32[2]{0}', space=sflag, size = 0x8, scoped, tag = 'scoped memory for dipol_dscr_forward.3']
    %21 = vsyncpa [#allocation4], 0
    %s22 = scalar_lea.sflag [#allocation4], 1
    %23 = vsyncpa %s22, 0
    loop: start=0, step=1, limit=4
    $region2: #{dipol_dscr_forward.3} parent=1 // loop_pre_header
      _
    $region3: #{dipol_dscr_forward.3} parent=1 // loop_header
      %s25 = sphi 0, %s29
      %p26 = scmp.ge.s32.totalorder %s25, 4
      %s35 = sphi 0, %s37
      %s38 = sphi 0, %s35
      %s39 = sphi 0, %s38
      %s55 = sphi 0, %s39
      %s61 = sphi 0, %s63
      %s64 = sphi 0, %s61
      %s65 = sphi 0, %s64
      %s81 = sphi 0, %s65
      %s85 = sphi 0, %s85
      %s87 = sphi 0, %s85
      %s88 = sphi 0, %s87
      %s102 = sphi 0, %s88
      %s106 = sphi 0, %s106
      %s108 = sphi 0, %s106
      %s109 = sphi 0, %s108
      %s123 = sphi 0, %s109
      %s127 = sphi 0, %s127
      %s129 = sphi 0, %s127
      %s130 = sphi 0, %s129
      %s144 = sphi 0, %s130
      %s148 = sphi 0, %s148
      %s150 = sphi 0, %s148
      %s151 = sphi 0, %s150
      %s165 = sphi 0, %s151
      %s169 = sphi 0, %s169
      %s171 = sphi 0, %s169
      %s172 = sphi 0, %s171
      %s186 = sphi 0, %s172
      %s190 = sphi 0, %s190
      %s192 = sphi 0, %s190
      %s193 = sphi 0, %s192
      %s207 = sphi 0, %s193
      %s211 = sphi 0, %s211
      %s213 = sphi 0, %s211
      %s214 = sphi 0, %s213
      %s228 = sphi 0, %s214
      %s232 = sphi 0, %s232
      %s234 = sphi 0, %s232
      %s235 = sphi 0, %s234
      %s249 = sphi 0, %s235
      %s255 = sphi 0, %s257
      %s258 = sphi 0, %s255
      %s259 = sphi 0, %s258
      %s275 = sphi 0, %s259
      %s281 = sphi 0, %s283
      %s284 = sphi 0, %s281
      %s285 = sphi 0, %s284
      %s301 = sphi 0, %s285
      %s307 = sphi 0, %s309
      %s310 = sphi 0, %s307
      %s311 = sphi 0, %s310
      %s327 = sphi 0, %s311
      %s333 = sphi 0, %s335
      %s336 = sphi 0, %s333
      %s337 = sphi 0, %s336
      %s353 = sphi 0, %s337
    $region4: #{dipol_dscr_forward.3} parent=1 // loop_header_branch
      %28 = sbr.rel (%p26) target = $region8
    $region5: #{dipol_dscr_forward.3} parent=1 // loop_body
      %s30 = ssub.s32 %s25, 1
      %s31 = ssub.s32 %s25, 2
      %s32 = sadd.s32 %s25, 1
      %s33 = ssub.s32 %s25, %s32
      %p34 = scmp.eq.s32.totalorder %s33, 0
      %s36 = sadd.s32 %s35, 1
      %s37 = scalar_select %p34, %s35, %s36
      %p40 = pneg %p34
      %p41 = scmp.eq.s32.totalorder %s25, 1
      %p42 = por %p40, %p41
      %p43 = scmp.ne.s32.totalorder %s35, %s38
      %p44 = scmp.eq.s32.totalorder %s25, 0
      %p45 = por %p43, %p44
      %p46 = scmp.ne.s32.totalorder %s35, %s38
      %p47 = scmp.eq.s32.totalorder %s30, 1
      %p48 = por %p46, %p47
      %p49 = scmp.ne.s32.totalorder %s38, %s39
      %p50 = scmp.eq.s32.totalorder %s30, 0
      %p51 = por %p49, %p50
      %p52 = scmp.ne.s32.totalorder %s38, %s39
      %p53 = scmp.eq.s32.totalorder %s31, 1
      %p54 = por %p52, %p53
      %p56 = scmp.ne.s32.totalorder %s39, %s55
      %p57 = scmp.eq.s32.totalorder %s31, 0
      %p58 = por %p56, %p57
      %s59 = ssub.s32 %s25, %s32
      %p60 = scmp.eq.s32.totalorder %s59, 0
      %s62 = sadd.s32 %s61, 1
      %s63 = scalar_select %p60, %s61, %s62
      %p66 = pneg %p60
      %p67 = scmp.eq.s32.totalorder %s25, 1
      %p68 = por %p66, %p67
      %p69 = scmp.ne.s32.totalorder %s61, %s64
      %p70 = scmp.eq.s32.totalorder %s25, 0
      %p71 = por %p69, %p70
      %p72 = scmp.ne.s32.totalorder %s61, %s64
      %p73 = scmp.eq.s32.totalorder %s30, 1
      %p74 = por %p72, %p73
      %p75 = scmp.ne.s32.totalorder %s64, %s65
      %p76 = scmp.eq.s32.totalorder %s30, 0
      %p77 = por %p75, %p76
      %p78 = scmp.ne.s32.totalorder %s64, %s65
      %p79 = scmp.eq.s32.totalorder %s31, 1
      %p80 = por %p78, %p79
      %p82 = scmp.ne.s32.totalorder %s65, %s81
      %p83 = scmp.eq.s32.totalorder %s31, 0
      %p84 = por %p82, %p83
      %s86 = sadd.s32 %s85, 1
      %p89 = scmp.eq.s32.totalorder %s25, 1
      %p90 = scmp.ne.s32.totalorder %s85, %s87
      %p91 = scmp.eq.s32.totalorder %s25, 0
      %p92 = por %p90, %p91
      %p93 = scmp.ne.s32.totalorder %s85, %s87
      %p94 = scmp.eq.s32.totalorder %s30, 1
      %p95 = por %p93, %p94
      %p96 = scmp.ne.s32.totalorder %s87, %s88
      %p97 = scmp.eq.s32.totalorder %s30, 0
      %p98 = por %p96, %p97
      %p99 = scmp.ne.s32.totalorder %s87, %s88
      %p100 = scmp.eq.s32.totalorder %s31, 1
      %p101 = por %p99, %p100
      %p103 = scmp.ne.s32.totalorder %s88, %s102
      %p104 = scmp.eq.s32.totalorder %s31, 0
      %p105 = por %p103, %p104
      %s107 = sadd.s32 %s106, 1
      %p110 = scmp.eq.s32.totalorder %s25, 1
      %p111 = scmp.ne.s32.totalorder %s106, %s108
      %p112 = scmp.eq.s32.totalorder %s25, 0
      %p113 = por %p111, %p112
      %p114 = scmp.ne.s32.totalorder %s106, %s108
      %p115 = scmp.eq.s32.totalorder %s30, 1
      %p116 = por %p114, %p115
      %p117 = scmp.ne.s32.totalorder %s108, %s109
      %p118 = scmp.eq.s32.totalorder %s30, 0
      %p119 = por %p117, %p118
      %p120 = scmp.ne.s32.totalorder %s108, %s109
      %p121 = scmp.eq.s32.totalorder %s31, 1
      %p122 = por %p120, %p121
      %p124 = scmp.ne.s32.totalorder %s109, %s123
      %p125 = scmp.eq.s32.totalorder %s31, 0
      %p126 = por %p124, %p125
      %s128 = sadd.s32 %s127, 1
      %p131 = scmp.eq.s32.totalorder %s25, 1
      %p132 = scmp.ne.s32.totalorder %s127, %s129
      %p133 = scmp.eq.s32.totalorder %s25, 0
      %p134 = por %p132, %p133
      %p135 = scmp.ne.s32.totalorder %s127, %s129
      %p136 = scmp.eq.s32.totalorder %s30, 1
      %p137 = por %p135, %p136
      %p138 = scmp.ne.s32.totalorder %s129, %s130
      %p139 = scmp.eq.s32.totalorder %s30, 0
      %p140 = por %p138, %p139
      %p141 = scmp.ne.s32.totalorder %s129, %s130
      %p142 = scmp.eq.s32.totalorder %s31, 1
      %p143 = por %p141, %p142
      %p145 = scmp.ne.s32.totalorder %s130, %s144
      %p146 = scmp.eq.s32.totalorder %s31, 0
      %p147 = por %p145, %p146
      %s149 = sadd.s32 %s148, 1
      %p152 = scmp.eq.s32.totalorder %s25, 1
      %p153 = scmp.ne.s32.totalorder %s148, %s150
      %p154 = scmp.eq.s32.totalorder %s25, 0
      %p155 = por %p153, %p154
      %p156 = scmp.ne.s32.totalorder %s148, %s150
      %p157 = scmp.eq.s32.totalorder %s30, 1
      %p158 = por %p156, %p157
      %p159 = scmp.ne.s32.totalorder %s150, %s151
      %p160 = scmp.eq.s32.totalorder %s30, 0
      %p161 = por %p159, %p160
      %p162 = scmp.ne.s32.totalorder %s150, %s151
      %p163 = scmp.eq.s32.totalorder %s31, 1
      %p164 = por %p162, %p163
      %p166 = scmp.ne.s32.totalorder %s151, %s165
      %p167 = scmp.eq.s32.totalorder %s31, 0
      %p168 = por %p166, %p167
      %s170 = sadd.s32 %s169, 1
      %p173 = scmp.eq.s32.totalorder %s25, 1
      %p174 = scmp.ne.s32.totalorder %s169, %s171
      %p175 = scmp.eq.s32.totalorder %s25, 0
      %p176 = por %p174, %p175
      %p177 = scmp.ne.s32.totalorder %s169, %s171
      %p178 = scmp.eq.s32.totalorder %s30, 1
      %p179 = por %p177, %p178
      %p180 = scmp.ne.s32.totalorder %s171, %s172
      %p181 = scmp.eq.s32.totalorder %s30, 0
      %p182 = por %p180, %p181
      %p183 = scmp.ne.s32.totalorder %s171, %s172
      %p184 = scmp.eq.s32.totalorder %s31, 1
      %p185 = por %p183, %p184
      %p187 = scmp.ne.s32.totalorder %s172, %s186
      %p188 = scmp.eq.s32.totalorder %s31, 0
      %p189 = por %p187, %p188
      %s191 = sadd.s32 %s190, 1
      %p194 = scmp.eq.s32.totalorder %s25, 1
      %p195 = scmp.ne.s32.totalorder %s190, %s192
      %p196 = scmp.eq.s32.totalorder %s25, 0
      %p197 = por %p195, %p196
      %p198 = scmp.ne.s32.totalorder %s190, %s192
      %p199 = scmp.eq.s32.totalorder %s30, 1
      %p200 = por %p198, %p199
      %p201 = scmp.ne.s32.totalorder %s192, %s193
      %p202 = scmp.eq.s32.totalorder %s30, 0
      %p203 = por %p201, %p202
      %p204 = scmp.ne.s32.totalorder %s192, %s193
      %p205 = scmp.eq.s32.totalorder %s31, 1
      %p206 = por %p204, %p205
      %p208 = scmp.ne.s32.totalorder %s193, %s207
      %p209 = scmp.eq.s32.totalorder %s31, 0
      %p210 = por %p208, %p209
      %s212 = sadd.s32 %s211, 1
      %p215 = scmp.eq.s32.totalorder %s25, 1
      %p216 = scmp.ne.s32.totalorder %s211, %s213
      %p217 = scmp.eq.s32.totalorder %s25, 0
      %p218 = por %p216, %p217
      %p219 = scmp.ne.s32.totalorder %s211, %s213
      %p220 = scmp.eq.s32.totalorder %s30, 1
      %p221 = por %p219, %p220
      %p222 = scmp.ne.s32.totalorder %s213, %s214
      %p223 = scmp.eq.s32.totalorder %s30, 0
      %p224 = por %p222, %p223
      %p225 = scmp.ne.s32.totalorder %s213, %s214
      %p226 = scmp.eq.s32.totalorder %s31, 1
      %p227 = por %p225, %p226
      %p229 = scmp.ne.s32.totalorder %s214, %s228
      %p230 = scmp.eq.s32.totalorder %s31, 0
      %p231 = por %p229, %p230
      %s233 = sadd.s32 %s232, 1
      %p236 = scmp.eq.s32.totalorder %s25, 1
      %p237 = scmp.ne.s32.totalorder %s232, %s234
      %p238 = scmp.eq.s32.totalorder %s25, 0
      %p239 = por %p237, %p238
      %p240 = scmp.ne.s32.totalorder %s232, %s234
      %p241 = scmp.eq.s32.totalorder %s30, 1
      %p242 = por %p240, %p241
      %p243 = scmp.ne.s32.totalorder %s234, %s235
      %p244 = scmp.eq.s32.totalorder %s30, 0
      %p245 = por %p243, %p244
      %p246 = scmp.ne.s32.totalorder %s234, %s235
      %p247 = scmp.eq.s32.totalorder %s31, 1
      %p248 = por %p246, %p247
      %p250 = scmp.ne.s32.totalorder %s235, %s249
      %p251 = scmp.eq.s32.totalorder %s31, 0
      %p252 = por %p250, %p251
      %s253 = ssub.s32 %s25, %s32
      %p254 = scmp.eq.s32.totalorder %s253, 0
      %s256 = sadd.s32 %s255, 1
      %s257 = scalar_select %p254, %s255, %s256
      %p260 = pneg %p254
      %p261 = scmp.eq.s32.totalorder %s25, 1
      %p262 = por %p260, %p261
      %p263 = scmp.ne.s32.totalorder %s255, %s258
      %p264 = scmp.eq.s32.totalorder %s25, 0
      %p265 = por %p263, %p264
      %p266 = scmp.ne.s32.totalorder %s255, %s258
      %p267 = scmp.eq.s32.totalorder %s30, 1
      %p268 = por %p266, %p267
      %p269 = scmp.ne.s32.totalorder %s258, %s259
      %p270 = scmp.eq.s32.totalorder %s30, 0
      %p271 = por %p269, %p270
      %p272 = scmp.ne.s32.totalorder %s258, %s259
      %p273 = scmp.eq.s32.totalorder %s31, 1
      %p274 = por %p272, %p273
      %p276 = scmp.ne.s32.totalorder %s259, %s275
      %p277 = scmp.eq.s32.totalorder %s31, 0
      %p278 = por %p276, %p277
      %s279 = ssub.s32 %s25, %s32
      %p280 = scmp.eq.s32.totalorder %s279, 0
      %s282 = sadd.s32 %s281, 1
      %s283 = scalar_select %p280, %s281, %s282
      %p286 = pneg %p280
      %p287 = scmp.eq.s32.totalorder %s25, 1
      %p288 = por %p286, %p287
      %p289 = scmp.ne.s32.totalorder %s281, %s284
      %p290 = scmp.eq.s32.totalorder %s25, 0
      %p291 = por %p289, %p290
      %p292 = scmp.ne.s32.totalorder %s281, %s284
      %p293 = scmp.eq.s32.totalorder %s30, 1
      %p294 = por %p292, %p293
      %p295 = scmp.ne.s32.totalorder %s284, %s285
      %p296 = scmp.eq.s32.totalorder %s30, 0
      %p297 = por %p295, %p296
      %p298 = scmp.ne.s32.totalorder %s284, %s285
      %p299 = scmp.eq.s32.totalorder %s31, 1
      %p300 = por %p298, %p299
      %p302 = scmp.ne.s32.totalorder %s285, %s301
      %p303 = scmp.eq.s32.totalorder %s31, 0
      %p304 = por %p302, %p303
      %s305 = ssub.s32 %s25, %s32
      %p306 = scmp.eq.s32.totalorder %s305, 0
      %s308 = sadd.s32 %s307, 1
      %s309 = scalar_select %p306, %s307, %s308
      %p312 = pneg %p306
      %p313 = scmp.eq.s32.totalorder %s25, 1
      %p314 = por %p312, %p313
      %p315 = scmp.ne.s32.totalorder %s307, %s310
      %p316 = scmp.eq.s32.totalorder %s25, 0
      %p317 = por %p315, %p316
      %p318 = scmp.ne.s32.totalorder %s307, %s310
      %p319 = scmp.eq.s32.totalorder %s30, 1
      %p320 = por %p318, %p319
      %p321 = scmp.ne.s32.totalorder %s310, %s311
      %p322 = scmp.eq.s32.totalorder %s30, 0
      %p323 = por %p321, %p322
      %p324 = scmp.ne.s32.totalorder %s310, %s311
      %p325 = scmp.eq.s32.totalorder %s31, 1
      %p326 = por %p324, %p325
      %p328 = scmp.ne.s32.totalorder %s311, %s327
      %p329 = scmp.eq.s32.totalorder %s31, 0
      %p330 = por %p328, %p329
      %s331 = ssub.s32 %s25, %s32
      %p332 = scmp.eq.s32.totalorder %s331, 0
      %s334 = sadd.s32 %s333, 1
      %s335 = scalar_select %p332, %s333, %s334
      %p338 = pneg %p332
      %p339 = scmp.eq.s32.totalorder %s25, 1
      %p340 = por %p338, %p339
      %p341 = scmp.ne.s32.totalorder %s333, %s336
      %p342 = scmp.eq.s32.totalorder %s25, 0
      %p343 = por %p341, %p342
      %p344 = scmp.ne.s32.totalorder %s333, %s336
      %p345 = scmp.eq.s32.totalorder %s30, 1
      %p346 = por %p344, %p345
      %p347 = scmp.ne.s32.totalorder %s336, %s337
      %p348 = scmp.eq.s32.totalorder %s30, 0
      %p349 = por %p347, %p348
      %p350 = scmp.ne.s32.totalorder %s336, %s337
      %p351 = scmp.eq.s32.totalorder %s31, 1
      %p352 = por %p350, %p351
      %p354 = scmp.ne.s32.totalorder %s337, %s353
      %p355 = scmp.eq.s32.totalorder %s31, 0
      %p356 = por %p354, %p355
      %p357 = scmp.le.s32.totalorder 1, %s25
      %p358 = scmp.lt.s32.totalorder %s25, 3
      %p359 = pnand %p357, %p358
      %p360 = pneg %p359
      // Predicated region
      $region9: #{dipol_dscr_forward.3} parent=5 // pred_check
        _
      $region10: #{dipol_dscr_forward.3} parent=5 // pred_check_branch
        %362 = sbr.rel (%p359) target = $region12
      $region11: #{dipol_dscr_forward.3} parent=5 // pred_region
        %s363 = ssub.s32 %s25, 1
        // Predicated region
        $region13: #{dipol_dscr_forward.3} parent=11 // pred_check
          %p364 = pneg %p98
        $region14: #{dipol_dscr_forward.3} parent=11 // pred_check_branch
          %366 = sbr.rel (%p364) target = $region16
        $region15: #{dipol_dscr_forward.3} parent=11 // pred_region
          _
        $region16: #{dipol_dscr_forward.3} parent=11 // pred_fallthru
          _
        // Predicated region
        $region17: #{dipol_dscr_forward.3} parent=11 // pred_check
          %p367 = pneg %p119
        $region18: #{dipol_dscr_forward.3} parent=11 // pred_check_branch
          %369 = sbr.rel (%p367) target = $region20
        $region19: #{dipol_dscr_forward.3} parent=11 // pred_region
          _
        $region20: #{dipol_dscr_forward.3} parent=11 // pred_fallthru
          _
        // Predicated region
        $region21: #{dipol_dscr_forward.3} parent=11 // pred_check
          %p370 = pneg %p140
        $region22: #{dipol_dscr_forward.3} parent=11 // pred_check_branch
          %372 = sbr.rel (%p370) target = $region24
        $region23: #{dipol_dscr_forward.3} parent=11 // pred_region
          _
        $region24: #{dipol_dscr_forward.3} parent=11 // pred_fallthru
          _
        // Predicated region
        $region25: #{dipol_dscr_forward.3} parent=11 // pred_check
          %p373 = pneg %p161
        $region26: #{dipol_dscr_forward.3} parent=11 // pred_check_branch
          %375 = sbr.rel (%p373) target = $region28
        $region27: #{dipol_dscr_forward.3} parent=11 // pred_region
          _
        $region28: #{dipol_dscr_forward.3} parent=11 // pred_fallthru
          _
        // Predicated region
        $region29: #{dipol_dscr_forward.3} parent=11 // pred_check
          %p376 = pneg %p182
        $region30: #{dipol_dscr_forward.3} parent=11 // pred_check_branch
          %378 = sbr.rel (%p376) target = $region32
        $region31: #{dipol_dscr_forward.3} parent=11 // pred_region
          _
        $region32: #{dipol_dscr_forward.3} parent=11 // pred_fallthru
          _
        // Predicated region
        $region33: #{dipol_dscr_forward.3} parent=11 // pred_check
          %p379 = pneg %p203
        $region34: #{dipol_dscr_forward.3} parent=11 // pred_check_branch
          %381 = sbr.rel (%p379) target = $region36
        $region35: #{dipol_dscr_forward.3} parent=11 // pred_region
          _
        $region36: #{dipol_dscr_forward.3} parent=11 // pred_fallthru
          _
        // Predicated region
        $region37: #{dipol_dscr_forward.3} parent=11 // pred_check
          %p382 = pneg %p224
        $region38: #{dipol_dscr_forward.3} parent=11 // pred_check_branch
          %384 = sbr.rel (%p382) target = $region40
        $region39: #{dipol_dscr_forward.3} parent=11 // pred_region
          _
        $region40: #{dipol_dscr_forward.3} parent=11 // pred_fallthru
          _
        // Predicated region
        $region41: #{dipol_dscr_forward.3} parent=11 // pred_check
          %p385 = pneg %p245
        $region42: #{dipol_dscr_forward.3} parent=11 // pred_check_branch
          %387 = sbr.rel (%p385) target = $region44
        $region43: #{dipol_dscr_forward.3} parent=11 // pred_region
          _
        $region44: #{dipol_dscr_forward.3} parent=11 // pred_fallthru
          _
      $region12: #{dipol_dscr_forward.3} parent=5 // pred_fallthru
        _
      %p388 = scmp.lt.s32.totalorder %s25, 2
      // Predicated region
      $region45: #{dipol_dscr_forward.3} parent=5 // pred_check
        %p389 = pneg %p388
      $region46: #{dipol_dscr_forward.3} parent=5 // pred_check_branch
        %391 = sbr.rel (%p389) target = $region48
      $region47: #{dipol_dscr_forward.3} parent=5 // pred_region
        // Predicated region
        $region49: #{dipol_dscr_forward.3} parent=47 // pred_check
          %p392 = pneg %p45
        $region50: #{dipol_dscr_forward.3} parent=47 // pred_check_branch
          %394 = sbr.rel (%p392) target = $region52
        $region51: #{dipol_dscr_forward.3} parent=47 // pred_region
          %p395 = scmp.lt.s32.totalorder %s25, 1
          %s396 = scalar_select %p395, %s25, 1
          %s397 = smul.addr %s396, 4
          %s398 = scalar_lea.vmem %s0, %s397
        $region52: #{dipol_dscr_forward.3} parent=47 // pred_fallthru
          _
        // Predicated region
        $region53: #{dipol_dscr_forward.3} parent=47 // pred_check
          %p399 = pneg %p71
        $region54: #{dipol_dscr_forward.3} parent=47 // pred_check_branch
          %401 = sbr.rel (%p399) target = $region56
        $region55: #{dipol_dscr_forward.3} parent=47 // pred_region
          %p402 = scmp.lt.s32.totalorder %s25, 1
          %s403 = scalar_select %p402, %s25, 1
          %s404 = smul.addr %s403, 4
          %s405 = scalar_lea.vmem %s1, %s404
        $region56: #{dipol_dscr_forward.3} parent=47 // pred_fallthru
          _
      $region48: #{dipol_dscr_forward.3} parent=5 // pred_fallthru
        _
      %p406 = scmp.le.s32.totalorder 1, %s25
      %p407 = scmp.lt.s32.totalorder %s25, 3
      %p408 = pnand %p406, %p407
      %p409 = pneg %p408
      // Predicated region
      $region57: #{dipol_dscr_forward.3} parent=5 // pred_check
        _
      $region58: #{dipol_dscr_forward.3} parent=5 // pred_check_branch
        %411 = sbr.rel (%p408) target = $region60
      $region59: #{dipol_dscr_forward.3} parent=5 // pred_region
        %s412 = ssub.s32 %s25, 1
        %p413 = scmp.lt.s32.totalorder %s30, 1
        %s414 = scalar_select %p413, %s30, 1
        %s415 = smul.addr %s414, 4
        %s416 = scalar_lea.vmem %s0, %s415
        %p417 = pneg %p51
        %p418 = pneg %p48
        %p419 = scmp.lt.s32.totalorder %s30, 1
        %s420 = scalar_select %p419, %s30, 1
        %s421 = smul.addr %s420, 4
        %s422 = scalar_lea.vmem %s1, %s421
        %p423 = pneg %p77
        %p424 = pneg %p74
        %p425 = pneg %p98
        %p426 = pneg %p95
        %p427 = pneg %p119
        %p428 = pneg %p116
        %p429 = pneg %p140
        %p430 = pneg %p137
        %p431 = pneg %p161
        %p432 = pneg %p158
        %p433 = pneg %p182
        %p434 = pneg %p179
        %p435 = pneg %p203
        %p436 = pneg %p200
        %p437 = pneg %p224
        %p438 = pneg %p221
        %p439 = pneg %p245
        %p440 = pneg %p242
        %p441 = pneg %p271
        %p442 = pneg %p268
        %p443 = scmp.lt.s32.totalorder %s30, 1
        %s444 = scalar_select %p443, %s30, 1
        %s445 = scalar_lea.vmem %s10, %s444
        %p446 = pneg %p297
        %p447 = pneg %p294
        %s448 = sand.u32 %s284, 1
        %s449 = scalar_lea.sflag [#allocation4], %s448
        %s450 = sand.u32 %s284, 1
        %s451 = scalar_lea.vmem [#allocation3], %s450
        %p452 = pneg %p323
        %p453 = pneg %p320
        %p454 = scmp.lt.s32.totalorder %s30, 1
        %s455 = scalar_select %p454, %s30, 1
        %s456 = scalar_lea.vmem %s12, %s455
        %p457 = pneg %p349
        %p458 = pneg %p346
        %p459 = scmp.lt.s32.totalorder %s30, 1
        %s460 = scalar_select %p459, %s30, 1
        %s461 = scalar_lea.vmem %s13, %s460
        %p462 = scmp.lt.s32.totalorder %s30, 1
        %s463 = scalar_select %p462, %s30, 1
        %s464 = smul.addr %s463, 4
        %s465 = scalar_lea.vmem %s0, %s464
        %p466 = scmp.lt.s32.totalorder %s30, 1
        %s467 = scalar_select %p466, %s30, 1
        %s468 = smul.addr %s467, 4
        %s469 = scalar_lea.vmem %s1, %s468
        %p470 = scmp.lt.s32.totalorder %s30, 1
        %s471 = scalar_select %p470, %s30, 1
        %s472 = scalar_lea.vmem %s10, %s471
        %p473 = scmp.lt.s32.totalorder %s30, 1
        %s474 = scalar_select %p473, %s30, 1
        %s475 = scalar_lea.vmem %s12, %s474
        %p476 = scmp.lt.s32.totalorder %s30, 1
        %s477 = scalar_select %p476, %s30, 1
        %s478 = scalar_lea.vmem %s13, %s477
        %v479 = vld [vmem:[%s465] sm:$0xf]
        %v480 = vld [vmem:[%s469] sm:$0xf]
        %vm481 = vcmask 31744
        %v483 = vsel %vm481, %v479, 0
        %vm485 = vcmask 1043456
        %v487 = vsel %vm485, %v480, 0
        %489 = vmatpush.msra.mxu0 0.0
        %490 = vmatpush.msra.mxu0 0.0
        %491 = vmatpush.msra.mxu0 0.0
        %492 = vmatpush.msra.mxu0 0.0
        %493 = vmatpush.msra.mxu0 0.0
        %494 = vmatpush.msra.mxu0 0.0
        %495 = vmatpush.msra.mxu0 0.0
        %496 = vmatpush.msra.mxu0 0.0
        %497 = vmatpush.msra.mxu0 0.0
        %498 = vmatpush.msra.mxu0 0.0
        %499 = vmatpush.msra.mxu0 0.0
        %500 = vmatpush.msra.mxu0 0.0
        %501 = vmatpush.msra.mxu0 0.0
        %502 = vmatpush.msra.mxu0 0.0
        %503 = vmatpush.msra.mxu0 0.0
        %504 = vmatpush.msra.mxu0 %v487
        %505 = vmatmul.f32.gmra.mxu0 %v483
        %v506 = vpop.f32.mrf.mxu0
        %v507 = vadd.f32 0.0, %v506
        %508 = vdwg.mxu0
        %v509 = vld [vmem:[%s2] sm:$0xff]
        %v510 = vld [vmem:[%s2 + $0x8] sm:$0xff]
        %v511 = vld [vmem:[%s2 + $0x10] sm:$0xff]
        %v512 = vld [vmem:[%s2 + $0x18] sm:$0xff]
        %vm513 = vcmask 261120
        %v515 = vsel %vm513, %v507, 0
        %517 = vmatpush.msra.mxu0 0.0
        %518 = vmatpush.msra.mxu0 0.0
        %519 = vmatpush.msra.mxu0 0.0
        %520 = vmatpush.msra.mxu0 0.0
        %521 = vmatpush.msra.mxu0 0.0
        %522 = vmatpush.msra.mxu0 0.0
        %523 = vmatpush.msra.mxu0 0.0
        %524 = vmatpush.msra.mxu0 0.0
        %525 = vmatpush.msra.mxu0 0.0
        %526 = vmatpush.msra.mxu0 0.0
        %527 = vmatpush.msra.mxu0 0.0
        %528 = vmatpush.msra.mxu0 0.0
        %529 = vmatpush.msra.mxu0 %v512
        %530 = vmatpush.msra.mxu0 %v511
        %531 = vmatpush.msra.mxu0 %v510
        %532 = vmatpush.msra.mxu0 %v509
        %533 = vmatmul.f32.gmra.mxu0 %v515
        %v534 = vpop.f32.mrf.mxu0
        %v535 = vadd.f32 0.0, %v534
        %536 = vdwg.mxu0
        %v537 = vmax.f32 %v535, 0.0
        %v538 = vld [vmem:[%s3] sm:$0xff]
        %v539 = vld [vmem:[%s3 + $0x8] sm:$0xff]
        %v540 = vld [vmem:[%s3 + $0x10] sm:$0xff]
        %v541 = vld [vmem:[%s3 + $0x18] sm:$0xff]
        %542 = vmatpush.msra.mxu0 0.0
        %543 = vmatpush.msra.mxu0 0.0
        %544 = vmatpush.msra.mxu0 0.0
        %545 = vmatpush.msra.mxu0 0.0
        %546 = vmatpush.msra.mxu0 0.0
        %547 = vmatpush.msra.mxu0 0.0
        %548 = vmatpush.msra.mxu0 0.0
        %549 = vmatpush.msra.mxu0 0.0
        %550 = vmatpush.msra.mxu0 0.0
        %551 = vmatpush.msra.mxu0 0.0
        %552 = vmatpush.msra.mxu0 0.0
        %553 = vmatpush.msra.mxu0 0.0
        %554 = vmatpush.msra.mxu0 %v541
        %555 = vmatpush.msra.mxu0 %v540
        %556 = vmatpush.msra.mxu0 %v539
        %557 = vmatpush.msra.mxu0 %v538
        %558 = vmatmul.f32.gmra.mxu0 %v515
        %v559 = vpop.f32.mrf.mxu0
        %v560 = vadd.f32 0.0, %v559
        %561 = vdwg.mxu0
        %vm562 = vcmask 11264
        %v563 = vsel %vm562, %v560, -inf
        %564 = vmax.xlane.f32.xlu0 %v563
        %v565 = vpop.xlane.xlu0 %564
        %v566 = vsub.f32 %v560, %v565
        %v567 = vmul.f32 %v566, 1.442695
        %v568 = vpow.pop %v567
        %v569 = vsel %vm562, %v568, 0.0
        %570 = vadd.xlane.f32.xlu0 %v569
        %v571 = vpop.xlane.xlu0 %570
        %v572 = vrcp.pop %v571
        %v573 = vmul.f32 %v571, %v572
        %v574 = vsub.f32 1.0, %v573
        %v575 = vmul.f32 %v572, %v574
        %v576 = vadd.f32 %v572, %v575
        %vm577 = vweird.f32 %v571
        %vm578 = vweird.f32 %v572
        %vm579 = vmor %vm577, %vm578
        %v580 = vsel %vm579, %v572, %v576
        %v581 = vand.u32 2147483647, %v571
        %vm582 = vcmp.eq.f32.partialorder %v581, 8.507059e+37
        %v583 = vand.u32 %v571, 2147483648
        %v584 = vor.u32 1.1754944e-38, %v583
        %v585 = vsel %vm582, %v584, %v580
        %v586 = vmul.f32 %v568, %v585
        %587 = vxpose.xlu0.b32.start [1/16] %v586, 128
        %588 = vxpose.xlu0.b32.cont [2/16] 0.0, 128
        %589 = vxpose.xlu0.b32.cont [3/16] 0.0, 128
        %590 = vxpose.xlu0.b32.cont [4/16] 0.0, 128
        %591 = vxpose.xlu0.b32.cont [5/16] 0.0, 128
        %592 = vxpose.xlu0.b32.cont [6/16] 0.0, 128
        %593 = vxpose.xlu0.b32.cont [7/16] 0.0, 128
        %594 = vxpose.xlu0.b32.cont [8/16] 0.0, 128
        %595 = vxpose.xlu0.b32.cont [9/16] 0.0, 128
        %596 = vxpose.xlu0.b32.cont [10/16] 0.0, 128
        %597 = vxpose.xlu0.b32.cont [11/16] 0.0, 128
        %598 = vxpose.xlu0.b32.cont [12/16] 0.0, 128
        %599 = vxpose.xlu0.b32.cont [13/16] 0.0, 128
        %600 = vxpose.xlu0.b32.cont [14/16] 0.0, 128
        %601 = vxpose.xlu0.b32.cont [15/16] 0.0, 128
        %602 = vxpose.xlu0.b32.end [16/16] 0.0, 128
        %v603 = vpop.trf.xlu0
        %v604 = vpop.trf.xlu0
        %v605 = vpop.trf.xlu0
        %v606 = vpop.trf.xlu0
        %v607 = vpop.trf.xlu0
        %v608 = vpop.trf.xlu0
        %v609 = vpop.trf.xlu0
        %v610 = vpop.trf.xlu0
        %v611 = vpop.trf.xlu0
        %v612 = vpop.trf.xlu0
        %v613 = vpop.trf.xlu0
        %v614 = vpop.trf.xlu0
        %v615 = vpop.trf.xlu0
        %v616 = vpop.trf.xlu0
        %v617 = vpop.trf.xlu0
        %v618 = vpop.trf.xlu0
        %v620 = vsel %vm481, %v603, 0
        %v623 = vsel %vm485, %v537, 0
        %625 = vmatpush.msra.mxu0 0.0
        %626 = vmatpush.msra.mxu0 0.0
        %627 = vmatpush.msra.mxu0 0.0
        %628 = vmatpush.msra.mxu0 0.0
        %629 = vmatpush.msra.mxu0 0.0
        %630 = vmatpush.msra.mxu0 0.0
        %631 = vmatpush.msra.mxu0 0.0
        %632 = vmatpush.msra.mxu0 0.0
        %633 = vmatpush.msra.mxu0 0.0
        %634 = vmatpush.msra.mxu0 0.0
        %635 = vmatpush.msra.mxu0 0.0
        %636 = vmatpush.msra.mxu0 0.0
        %637 = vmatpush.msra.mxu0 0.0
        %638 = vmatpush.msra.mxu0 0.0
        %639 = vmatpush.msra.mxu0 0.0
        %640 = vmatpush.msra.mxu0 %v623
        %641 = vmatmul.f32.gmra.mxu0 %v620
        %v642 = vpop.f32.mrf.mxu0
        %v643 = vadd.f32 0.0, %v642
        %644 = vdwg.mxu0
        %vm645 = vcmask 15360
        %v647 = vsel %vm645, %v586, 0
        %649 = vmatpush.xpose.msra.mxu0 0.0
        %650 = vmatpush.xpose.msra.mxu0 0.0
        %651 = vmatpush.xpose.msra.mxu0 0.0
        %652 = vmatpush.xpose.msra.mxu0 0.0
        %653 = vmatpush.xpose.msra.mxu0 0.0
        %654 = vmatpush.xpose.msra.mxu0 0.0
        %655 = vmatpush.xpose.msra.mxu0 0.0
        %656 = vmatpush.xpose.msra.mxu0 0.0
        %657 = vmatpush.xpose.msra.mxu0 0.0
        %658 = vmatpush.xpose.msra.mxu0 0.0
        %659 = vmatpush.xpose.msra.mxu0 0.0
        %660 = vmatpush.xpose.msra.mxu0 0.0
        %661 = vmatpush.xpose.msra.mxu0 0.0
        %662 = vmatpush.xpose.msra.mxu0 0.0
        %663 = vmatpush.xpose.msra.mxu0 0.0
        %664 = vmatpush.xpose.msra.mxu0 %v647
        %665 = vmatmul.f32.gmra.mxu0 %v647
        %v666 = vpop.f32.mrf.mxu0
        %v667 = vadd.f32 0.0, %v666
        %668 = vdwg.mxu0
        %v669 = vsub.f32 %v479, %v667
        %v670 = vmul.f32 %v669, %v669
        %vm671 = vcmask 27648
        %v672 = vsel %vm671, %v670, 0.0
        %673 = vadd.xlane.f32.xlu0 %v672
        %v674 = vpop.xlane.xlu0 %673
        %v675 = vsel %vm485, %v674, 0.0
        %v676 = vrot.slane %v675, 4
        %v677 = vadd.f32 %v675, %v676
        %v678 = vrot.slane %v677, 2
        %v679 = vadd.f32 %v677, %v678
        %v680 = vrot.slane %v679, 1
        %v681 = vadd.f32 %v679, %v680
        %v682 = vadd.f32 %v681, 1e-12
        %v683 = vrsqrt.pop %v682
        %v684 = vmul.f32 %v683, %v682
        %v685 = vmul.f32 %v684, %v683
        %v686 = vmul.f32 0.5, %v685
        %v687 = vsub.f32 1.5, %v686
        %v688 = vmul.f32 %v683, %v687
        %v689 = vmul.f32 %v682, %v688
        %vm690 = vcmp.eq.f32.partialorder %v682, inf
        %v691 = vsel %vm690, %v682, %v689
        %vm692 = vcmp.eq.f32.partialorder %v682, 0.0
        %v693 = vand.u32 %v682, 2147483648
        %v694 = vsel %vm692, %v693, %v691
        %vm695 = vcmask 0
        %696 = vst.msk [vmem:[%s475] sm:$0x1] %vm695, %v694
        %v697 = vadd.f32 %v586, 1e-12
        %v698 = vlog2.pop %v697
        %v699 = vmul.f32 %v698, 0.6931472
        %v700 = vmul.f32 %v586, %v699
        %v701 = vsel %vm562, %v700, 0.0
        %702 = vadd.xlane.f32.xlu0 %v701
        %v703 = vpop.xlane.xlu0 %702
        %v704 = vsel %vm485, %v703, 0.0
        %v705 = vrot.slane %v704, 4
        %v706 = vadd.f32 %v704, %v705
        %v707 = vrot.slane %v706, 2
        %v708 = vadd.f32 %v706, %v707
        %v709 = vrot.slane %v708, 1
        %v710 = vadd.f32 %v708, %v709
        %v711 = vsub.f32 0.0, %v710
        %712 = vst.msk [vmem:[%s478] sm:$0x1] %vm695, %v711
        %v713 = vld [vmem:[%s5] sm:$0x1]
        %v714 = vld [vmem:[%s4] sm:$0xff]
        %v715 = vld [vmem:[%s4 + $0x8] sm:$0xff]
        %v716 = vld [vmem:[%s4 + $0x10] sm:$0xff]
        %v717 = vld [vmem:[%s4 + $0x18] sm:$0xff]
        %v719 = vsel %vm513, %v643, 0
        %721 = vmatpush.msra.mxu0 0.0
        %722 = vmatpush.msra.mxu0 0.0
        %723 = vmatpush.msra.mxu0 0.0
        %724 = vmatpush.msra.mxu0 0.0
        %725 = vmatpush.msra.mxu0 0.0
        %726 = vmatpush.msra.mxu0 0.0
        %727 = vmatpush.msra.mxu0 0.0
        %728 = vmatpush.msra.mxu0 0.0
        %729 = vmatpush.msra.mxu0 0.0
        %730 = vmatpush.msra.mxu0 0.0
        %731 = vmatpush.msra.mxu0 0.0
        %732 = vmatpush.msra.mxu0 0.0
        %733 = vmatpush.msra.mxu0 %v717
        %734 = vmatpush.msra.mxu0 %v716
        %735 = vmatpush.msra.mxu0 %v715
        %736 = vmatpush.msra.mxu0 %v714
        %737 = vmatmul.f32.gmra.mxu0 %v719
        %v738 = vpop.f32.mrf.mxu0
        %v739 = vadd.f32 0.0, %v738
        %740 = vdwg.mxu0
        %v741 = vadd.f32 %v713, %v739
        %s742 = scalar_lea.vmem %s4, 32
        %v743 = vld [vmem:[%s742] sm:$0xff]
        %v744 = vld [vmem:[%s742 + $0x8] sm:$0xff]
        %v745 = vld [vmem:[%s742 + $0x10] sm:$0xff]
        %v746 = vld [vmem:[%s742 + $0x18] sm:$0xff]
        %v747 = vrot.slane %v643, 1
        %v748 = vsel %vm513, %v747, 0
        %750 = vmatpush.msra.mxu0 0.0
        %751 = vmatpush.msra.mxu0 0.0
        %752 = vmatpush.msra.mxu0 0.0
        %753 = vmatpush.msra.mxu0 0.0
        %754 = vmatpush.msra.mxu0 0.0
        %755 = vmatpush.msra.mxu0 0.0
        %756 = vmatpush.msra.mxu0 0.0
        %757 = vmatpush.msra.mxu0 0.0
        %758 = vmatpush.msra.mxu0 0.0
        %759 = vmatpush.msra.mxu0 0.0
        %760 = vmatpush.msra.mxu0 0.0
        %761 = vmatpush.msra.mxu0 0.0
        %762 = vmatpush.msra.mxu0 %v746
        %763 = vmatpush.msra.mxu0 %v745
        %764 = vmatpush.msra.mxu0 %v744
        %765 = vmatpush.msra.mxu0 %v743
        %766 = vmatmul.f32.gmra.mxu0 %v748
        %v767 = vpop.f32.mrf.mxu0
        %v768 = vadd.f32 0.0, %v767
        %769 = vdwg.mxu0
        %v770 = vadd.f32 %v741, %v768
        %v771 = vmax.f32 %v770, 0.0
        %v772 = vld [vmem:[%s6] sm:$0xff]
        %v773 = vld [vmem:[%s6 + $0x8] sm:$0xff]
        %v774 = vld [vmem:[%s6 + $0x10] sm:$0xff]
        %v775 = vld [vmem:[%s6 + $0x18] sm:$0xff]
        %v776 = vld [vmem:[%s6 + $0x20] sm:$0xff]
        %v777 = vld [vmem:[%s6 + $0x28] sm:$0xff]
        %v778 = vld [vmem:[%s6 + $0x30] sm:$0xff]
        %v779 = vld [vmem:[%s6 + $0x38] sm:$0xff]
        %v780 = vld [vmem:[%s7] sm:$0x1]
        %vm781 = vcmask 523264
        %v783 = vsel %vm781, %v771, 0
        %785 = vmatpush.msra.mxu0 0.0
        %786 = vmatpush.msra.mxu0 0.0
        %787 = vmatpush.msra.mxu0 0.0
        %788 = vmatpush.msra.mxu0 0.0
        %789 = vmatpush.msra.mxu0 0.0
        %790 = vmatpush.msra.mxu0 0.0
        %791 = vmatpush.msra.mxu0 0.0
        %792 = vmatpush.msra.mxu0 0.0
        %793 = vmatpush.msra.mxu0 %v779
        %794 = vmatpush.msra.mxu0 %v778
        %795 = vmatpush.msra.mxu0 %v777
        %796 = vmatpush.msra.mxu0 %v776
        %797 = vmatpush.msra.mxu0 %v775
        %798 = vmatpush.msra.mxu0 %v774
        %799 = vmatpush.msra.mxu0 %v773
        %800 = vmatpush.msra.mxu0 %v772
        %801 = vmatmul.f32.gmra.mxu0 %v783
        %v802 = vpop.f32.mrf.mxu0
        %v803 = vadd.f32 %v780, %v802
        %804 = vdwg.mxu0
        %vm805 = vcmask 8192
        %806 = vst.msk [vmem:[%s451] sm:$0x1] %vm805, %v803
        %v807 = vld [vmem:[%s8] sm:$0xff]
        %v808 = vld [vmem:[%s8 + $0x8] sm:$0xff]
        %v809 = vld [vmem:[%s8 + $0x10] sm:$0xff]
        %v810 = vld [vmem:[%s8 + $0x18] sm:$0xff]
        %v811 = vld [vmem:[%s8 + $0x20] sm:$0xff]
        %v812 = vld [vmem:[%s8 + $0x28] sm:$0xff]
        %v813 = vld [vmem:[%s8 + $0x30] sm:$0xff]
        %v814 = vld [vmem:[%s8 + $0x38] sm:$0xff]
        %v815 = vld [vmem:[#allocation2] sm:$0x1]
        %816 = vmatpush.msra.mxu0 0.0
        %817 = vmatpush.msra.mxu0 0.0
        %818 = vmatpush.msra.mxu0 0.0
        %819 = vmatpush.msra.mxu0 0.0
        %820 = vmatpush.msra.mxu0 0.0
        %821 = vmatpush.msra.mxu0 0.0
        %822 = vmatpush.msra.mxu0 0.0
        %823 = vmatpush.msra.mxu0 0.0
        %824 = vmatpush.msra.mxu0 %v814
        %825 = vmatpush.msra.mxu0 %v813
        %826 = vmatpush.msra.mxu0 %v812
        %827 = vmatpush.msra.mxu0 %v811
        %828 = vmatpush.msra.mxu0 %v810
        %829 = vmatpush.msra.mxu0 %v809
        %830 = vmatpush.msra.mxu0 %v808
        %831 = vmatpush.msra.mxu0 %v807
        %832 = vmatmul.f32.gmra.mxu0 %v783
        %v833 = vpop.f32.mrf.mxu0
        %v834 = vadd.f32 %v815, %v833
        %835 = vdwg.mxu0
        %836 = vst.msk [vmem:[%s472] sm:$0x1] %vm695, %v834
        %p837 = scmp.lt.s32.totalorder %s30, 1
        %s838 = scalar_select %p837, %s30, 1
        %s839 = scalar_lea.vmem %s10, %s838
        %s840 = sand.u32 %s284, 1
        %s841 = scalar_lea.sflag [#allocation4], %s840
        %s842 = sand.u32 %s284, 1
        %s843 = scalar_lea.vmem [#allocation3], %s842
        %p844 = scmp.lt.s32.totalorder %s30, 1
        %s845 = scalar_select %p844, %s30, 1
        %s846 = scalar_lea.vmem %s12, %s845
        %p847 = scmp.lt.s32.totalorder %s30, 1
        %s848 = scalar_select %p847, %s30, 1
        %s849 = scalar_lea.vmem %s13, %s848
        // Predicated region
        $region61: #{dipol_dscr_forward.3} parent=59 // pred_check
          %p850 = pneg %p268
        $region62: #{dipol_dscr_forward.3} parent=59 // pred_check_branch
          %852 = sbr.rel (%p850) target = $region64
        $region63: #{dipol_dscr_forward.3} parent=59 // pred_region
          _
        $region64: #{dipol_dscr_forward.3} parent=59 // pred_fallthru
          _
        // Predicated region
        $region65: #{dipol_dscr_forward.3} parent=59 // pred_check
          %p853 = pneg %p294
        $region66: #{dipol_dscr_forward.3} parent=59 // pred_check_branch
          %855 = sbr.rel (%p853) target = $region68
        $region67: #{dipol_dscr_forward.3} parent=59 // pred_region
          %857 = vsyncadd %s841, 0
          %s858 = scalar_lea.hbm %s11, %s30
          %s860 = sshll.u32 %s843, 4
          %s861 = int_to_ptr.vmem [resolvable:$true] %s860
          %s862 = sshll.u32 %s858, 4
          %s863 = int_to_ptr.hbm [resolvable:$true] %s862
          %865 = dma.vmem_to_hbm [thread:$0]  %s861, 16, %s863, %s841
        $region68: #{dipol_dscr_forward.3} parent=59 // pred_fallthru
          _
        // Predicated region
        $region69: #{dipol_dscr_forward.3} parent=59 // pred_check
          %p866 = pneg %p320
        $region70: #{dipol_dscr_forward.3} parent=59 // pred_check_branch
          %868 = sbr.rel (%p866) target = $region72
        $region71: #{dipol_dscr_forward.3} parent=59 // pred_region
          _
        $region72: #{dipol_dscr_forward.3} parent=59 // pred_fallthru
          _
        // Predicated region
        $region73: #{dipol_dscr_forward.3} parent=59 // pred_check
          %p869 = pneg %p346
        $region74: #{dipol_dscr_forward.3} parent=59 // pred_check_branch
          %871 = sbr.rel (%p869) target = $region76
        $region75: #{dipol_dscr_forward.3} parent=59 // pred_region
          _
        $region76: #{dipol_dscr_forward.3} parent=59 // pred_fallthru
          _
      $region60: #{dipol_dscr_forward.3} parent=5 // pred_fallthru
        _
      %p872 = scmp.le.s32.totalorder 2, %s25
      // Predicated region
      $region77: #{dipol_dscr_forward.3} parent=5 // pred_check
        %p873 = pneg %p872
      $region78: #{dipol_dscr_forward.3} parent=5 // pred_check_branch
        %875 = sbr.rel (%p873) target = $region80
      $region79: #{dipol_dscr_forward.3} parent=5 // pred_region
        %s876 = ssub.s32 %s25, 2
        // Predicated region
        $region81: #{dipol_dscr_forward.3} parent=79 // pred_check
          %p877 = pneg %p274
        $region82: #{dipol_dscr_forward.3} parent=79 // pred_check_branch
          %879 = sbr.rel (%p877) target = $region84
        $region83: #{dipol_dscr_forward.3} parent=79 // pred_region
          %p880 = scmp.lt.s32.totalorder %s31, 1
          %s881 = scalar_select %p880, %s31, 1
          %s882 = scalar_lea.vmem %s10, %s881
        $region84: #{dipol_dscr_forward.3} parent=79 // pred_fallthru
          _
        // Predicated region
        $region85: #{dipol_dscr_forward.3} parent=79 // pred_check
          %p883 = pneg %p300
        $region86: #{dipol_dscr_forward.3} parent=79 // pred_check_branch
          %885 = sbr.rel (%p883) target = $region88
        $region87: #{dipol_dscr_forward.3} parent=79 // pred_region
          %s886 = sand.u32 %s285, 1
          %s887 = scalar_lea.sflag [#allocation4], %s886
          %s888 = sand.u32 %s285, 1
          %s889 = scalar_lea.vmem [#allocation3], %s888
          %891 = dma.done %s887, 16
        $region88: #{dipol_dscr_forward.3} parent=79 // pred_fallthru
          _
        // Predicated region
        $region89: #{dipol_dscr_forward.3} parent=79 // pred_check
          %p892 = pneg %p326
        $region90: #{dipol_dscr_forward.3} parent=79 // pred_check_branch
          %894 = sbr.rel (%p892) target = $region92
        $region91: #{dipol_dscr_forward.3} parent=79 // pred_region
          %p895 = scmp.lt.s32.totalorder %s31, 1
          %s896 = scalar_select %p895, %s31, 1
          %s897 = scalar_lea.vmem %s12, %s896
        $region92: #{dipol_dscr_forward.3} parent=79 // pred_fallthru
          _
        // Predicated region
        $region93: #{dipol_dscr_forward.3} parent=79 // pred_check
          %p898 = pneg %p352
        $region94: #{dipol_dscr_forward.3} parent=79 // pred_check_branch
          %900 = sbr.rel (%p898) target = $region96
        $region95: #{dipol_dscr_forward.3} parent=79 // pred_region
          %p901 = scmp.lt.s32.totalorder %s31, 1
          %s902 = scalar_select %p901, %s31, 1
          %s903 = scalar_lea.vmem %s13, %s902
        $region96: #{dipol_dscr_forward.3} parent=79 // pred_fallthru
          _
      $region80: #{dipol_dscr_forward.3} parent=5 // pred_fallthru
        _
    $region6: #{dipol_dscr_forward.3} parent=1 // loop_footer
      %s29 = sadd.s32 1, %s25
    $region7: #{dipol_dscr_forward.3} parent=1 // loop_footer_branch
      %24 = sbr.rel target = $region3
    $region8: #{dipol_dscr_forward.3} parent=1 // loop_exit
      _
    %904 = vsyncpa [#allocation4], 1
    %s905 = scalar_lea.sflag [#allocation4], 1
    %906 = vsyncpa %s905, 1

</llo_original>
